<compile_context>
chip_gen: v5e
topology: v5e:2x2
jax: 0.10.0
libtpu: 0.0.40
codegen_flags: <defaults>
</compile_context>

<pallas_src>
import math

import jax
import jax.numpy as jnp
from jax import lax
from jax.experimental import pallas as pl
from jax.experimental.pallas import tpu as pltpu


def _round_up(v, m):
    return (v + m - 1) // m * m


def _fold_bn(gamma, beta, mean, var, eps=0.001):
    scale = gamma / jnp.sqrt(var + eps)
    bias = beta - mean * scale
    return scale, bias


def _vmem_config():
    """(working-set budget, vmem_limit_bytes) per TPU generation."""
    cap = None
    try:
        info = pltpu.get_tpu_info()
        cap = getattr(info, "vmem_capacity_bytes", None)
    except Exception:
        cap = None
    if cap is None:
        cap = 64 * 1024 * 1024                       # conservative: v7x-sized VMEM
    if cap >= 100 * 1024 * 1024:                     # v5e / v6e: 128 MiB physical
        return 64 * 1024 * 1024, 100 * 1024 * 1024
    return 22 * 1024 * 1024, 44 * 1024 * 1024        # v7x: 64 MiB physical


def _auto_tile_rows(n_batch, h_out, w_out, w_pad, c_in_p, c_out_p, stride,
                    in_item, out_item, pw_item, budget_bytes, max_rows=256):
    """Largest output-row tile (th*w_out % 8 == 0) whose buffers fit the budget."""
    g = 8 // math.gcd(w_out, 8)                      # granule so th*w_out % 8 == 0
    n_halo = min(2, max(0, 3 - stride))

    def vmem_bytes(th):
        th_in = th * stride
        cr = max(1, min(th, -(-256 // w_out)))       # sub-chunk rows
        crw = stride * (cr - 1) + 3
        pipe = 2 * ((th_in + n_halo) * w_pad * c_in_p * in_item      # input + halos
                    + th * w_out * c_out_p * out_item                # output tile
                    + (9 + 1) * c_in_p * 4                           # dw weights + bias
                    + c_in_p * c_out_p * pw_item + c_out_p * 4)      # pw weights + bias
        work = 2 * (3 * crw * w_out * c_in_p * 4                     # 3 column slabs (f32)
                    + cr * w_out * c_in_p * 4                        # depthwise acc
                    + cr * w_out * (c_in_p * pw_item + c_out_p * 4)) # matmul in/out
        return pipe + work

    hi = max(1, min(h_out, max_rows))
    cands = sorted(set(list(range(g, hi + 1, g)) + [hi]))
    fits = [t for t in cands if vmem_bytes(t) <= budget_bytes]
    if fits:
        th = max(fits)
    else:
        th = 1
        for t in range(hi, 0, -1):
            if vmem_bytes(t) <= budget_bytes:
                th = t
                break
    # Batch 1: keep >= 2 balanced row tiles so both v7x TensorCores get work.
    if n_batch == 1 and th >= h_out and h_out > 1:
        half = -(-h_out // 2)
        th = max(1, (half // g) * g) if half >= g else half
    return th


def _make_kernel(stride, tile_rows, w_out, n_halo, chunk_rows):
    th = tile_rows
    wo = w_out
    th_in = th * stride

    def kernel(*refs):
        # refs: body, halo*n_halo, wdw(3,3,Cp), b1(1,Cp), wpw(Cp,Cop), b2(1,Cop), out
        xb_ref = refs[0]
        halo_refs = refs[1:1 + n_halo]
        wdw_ref, b1_ref, wpw_ref, b2_ref, o_ref = refs[1 + n_halo:]

        w = wdw_ref[...].astype(jnp.float32)        # BN scale already folded in
        b1 = b1_ref[0].astype(jnp.float32)          # (Cp,)
        b2 = b2_ref[...].astype(jnp.float32)        # (1, Cop)

        def window(a, b, kw=None):
            """Padded-input window rows [a, b); kw -> contiguous column shift (stride 1)."""
            pieces = []
            hi = min(b, th_in)
            if kw is None:
                pieces.append(xb_ref[0, a:hi])
            else:
                pieces.append(xb_ref[0, a:hi, kw:kw + wo])
            for j in range(n_halo):
                if a <= th_in + j < b:
                    if kw is None:
                        pieces.append(halo_refs[j][0, 0:1])
                    else:
                        pieces.append(halo_refs[j][0, 0:1, kw:kw + wo])
            x = pieces[0] if len(pieces) == 1 else jnp.concatenate(pieces, axis=0)
            return x.astype(jnp.float32)

        # Sub-chunks of output rows: keeps the (cr*wo, Cp) reshape sublane-aligned
        # and lets the scheduler overlap chunk i+1's VPU taps with chunk i's matmul.
        for r0 in range(0, th, chunk_rows):
            cr = min(chunk_rows, th - r0)
            a = r0 * stride
            nrows = stride * (cr - 1) + 3
            row_span = stride * (cr - 1) + 1
            step = None if stride == 1 else stride

            if stride == 1:
                # 3 column-shifted slabs loaded straight from the refs (no full-width copy)
                cols = [window(a, a + nrows, kw) for kw in range(3)]
            else:
                # TODO(synk): v5e would prefer contiguous loads + reshape decimation
                # here instead of strided sublane slices.
                xw = window(a, a + nrows)
                col_span = stride * (wo - 1) + 1
                cols = [xw[:, kw:kw + col_span:step, :] for kw in range(3)]

            acc = None
            for kh in range(3):
                rows = slice(kh, kh + row_span, step)
                for kw in range(3):
                    tap = cols[kw][rows] * w[kh, kw]
                    acc = tap if acc is None else acc + tap        # (cr, wo, Cp)

            y = jnp.maximum(acc + b1, 0.0)                         # fused BN bias + ReLU
            y2d = y.reshape(cr * wo, y.shape[-1]).astype(wpw_ref.dtype)
            z = jnp.dot(y2d, wpw_ref[...], preferred_element_type=jnp.float32)
            z = jnp.maximum(z + b2, 0.0)                           # fused BN bias + ReLU
            o_ref[0, r0:r0 + cr] = z.reshape(cr, wo, -1).astype(o_ref.dtype)

    return kernel


def depthwise_separable_conv_nhwc(x_nhwc, params, stride=1, *, tile_rows=None,
                                  chunk_rows=None, pw_compute_dtype=jnp.bfloat16,
                                  out_dtype=None, min_pallas_channels=0):
    """NHWC forward pass (preferred TPU layout; no NCHW<->NHWC HBM passes)."""
    w_dw = params["w_dw"]          # (Cin, 1, 3, 3)  PyTorch depthwise layout
    w_pw = params["w_pw"]          # (Cout, Cin, 1, 1)
    n, h, w, c_in = x_nhwc.shape
    c_out = w_pw.shape[0]

    # Lane-padding tiny channel counts to 128 is mostly zero traffic; optionally
    # hand such layers to XLA (disabled by default so the Pallas path is used).
    if min(c_in, c_out) < min_pallas_channels:
        x_nchw = jnp.transpose(x_nhwc, (0, 3, 1, 2))
        out = reference_forward(x_nchw, params, stride=stride)
        return jnp.transpose(out, (0, 2, 3, 1))

    s1, b1 = _fold_bn(params["g1"], params["be1"], params["m1"], params["v1"])
    s2, b2 = _fold_bn(params["g2"], params["be2"], params["m2"], params["v2"])
    out_dtype = x_nhwc.dtype if out_dtype is None else out_dtype

    h_out = (h + 2 - 3) // stride + 1
    w_out = (w + 2 - 3) // stride + 1
    w_pad = w + 2

    c_in_p = _round_up(c_in, 128)
    c_out_p = _round_up(c_out, 128)
    n_halo = min(2, max(0, 3 - stride))       # 2 halo rows for s=1, 1 for s=2, 0 above

    in_item = jnp.dtype(x_nhwc.dtype).itemsize
    out_item = jnp.dtype(out_dtype).itemsize
    pw_item = jnp.dtype(pw_compute_dtype).itemsize

    budget, vmem_limit = _vmem_config()
    if tile_rows is None:
        tile_rows = _auto_tile_rows(n, h_out, w_out, w_pad, c_in_p, c_out_p,
                                    stride, in_item, out_item, pw_item, budget)
    th = max(1, min(int(tile_rows), h_out))
    if chunk_rows is None:
        chunk_rows = max(1, min(th, -(-256 // w_out)))   # ~MXU-M-filling sub-chunks
    else:
        chunk_rows = max(1, min(int(chunk_rows), th))

    num_tiles = pl.cdiv(h_out, th)
    h_out_pad = num_tiles * th
    th_in = th * stride
    h_pad = h_out_pad * stride + 2

    # single fused pad: conv zero border (H, W) + zeroed channel lanes up to 128
    xp = jnp.pad(x_nhwc, ((0, 0), (1, h_pad - 1 - h), (1, 1), (0, c_in_p - c_in)))

    # Fold BN scales into the conv weights; the kernel only adds the biases.
    wdw = jnp.transpose(w_dw[:, 0, :, :], (1, 2, 0)) * s1                  # (3,3,Cin)
    wdw = jnp.pad(wdw, ((0, 0), (0, 0), (0, c_in_p - c_in)))               # (3,3,Cp)
    wpw = jnp.transpose(w_pw[:, :, 0, 0], (1, 0)) * s2[None, :]            # (Cin,Cout)
    wpw = jnp.pad(wpw, ((0, c_in_p - c_in), (0, c_out_p - c_out)))
    wpw = wpw.astype(pw_compute_dtype)                                      # bf16 MXU feed
    b1r = jnp.pad(b1, (0, c_in_p - c_in)).reshape(1, c_in_p)
    b2r = jnp.pad(b2, (0, c_out_p - c_out)).reshape(1, c_out_p)

    kernel = _make_kernel(stride, th, w_out, n_halo, chunk_rows)

    in_specs = [pl.BlockSpec((1, th_in, w_pad, c_in_p), lambda b, t: (b, t, 0, 0))]
    for j in range(n_halo):
        # halo rows just below the body (block size 1 -> block idx == row idx)
        in_specs.append(
            pl.BlockSpec((1, 1, w_pad, c_in_p),
                         lambda b, t, j=j: (b, (t + 1) * th_in + j, 0, 0)))
    # Grid-invariant operands (weights / biases); wpw is bf16 so the default
    # double-buffering costs little VMEM.
    in_specs += [
        pl.BlockSpec((3, 3, c_in_p), lambda b, t: (0, 0, 0)),
        pl.BlockSpec((1, c_in_p), lambda b, t: (0, 0)),
        pl.BlockSpec((c_in_p, c_out_p), lambda b, t: (0, 0)),
        pl.BlockSpec((1, c_out_p), lambda b, t: (0, 0)),
    ]

    cost = pl.CostEstimate(
        flops=2 * n * h_out * w_out * c_in * (9 + c_out),
        transcendentals=0,
        bytes_accessed=int(xp.size * in_item
                           + n * h_out_pad * w_out * c_out_p * out_item
                           + wdw.size * 4 + wpw.size * pw_item))

    out = pl.pallas_call(
        kernel,
        out_shape=jax.ShapeDtypeStruct((n, h_out_pad, w_out, c_out_p), out_dtype),
        grid=(n, num_tiles),
        in_specs=in_specs,
        out_specs=pl.BlockSpec((1, th, w_out, c_out_p), lambda b, t: (b, t, 0, 0)),
        compiler_params=pltpu.CompilerParams(
            dimension_semantics=("parallel", "parallel"),
            vmem_limit_bytes=vmem_limit),
        cost_estimate=cost,
    )(xp, *([xp] * n_halo), wdw, b1r, wpw, b2r)

    # strip padded output rows and padded output channels
    return out[:, :h_out, :, :c_out]


def depthwise_separable_conv(x_nchw, params, stride=1, **kwargs):
    """PyTorch-compatible NCHW wrapper (prefer the NHWC entry point on TPU)."""
    x = jnp.transpose(x_nchw, (0, 2, 3, 1))
    out = depthwise_separable_conv_nhwc(x, params, stride=stride, **kwargs)
    return jnp.transpose(out, (0, 3, 1, 2))


def reference_forward(x_nchw, params, stride=1):
    """Plain-JAX reference (lax convolutions), NCHW throughout."""
    w_dw = params["w_dw"]
    w_pw = params["w_pw"]
    s1, b1 = _fold_bn(params["g1"], params["be1"], params["m1"], params["v1"])
    s2, b2 = _fold_bn(params["g2"], params["be2"], params["m2"], params["v2"])
    c_in = x_nchw.shape[1]

    y = lax.conv_general_dilated(
        x_nchw, w_dw, (stride, stride), ((1, 1), (1, 1)),
        dimension_numbers=("NCHW", "OIHW", "NCHW"),
        feature_group_count=c_in)
    y = jnp.maximum(y * s1[None, :, None, None] + b1[None, :, None, None], 0.0)

    z = lax.conv_general_dilated(
        y, w_pw, (1, 1), ((0, 0), (0, 0)),
        dimension_numbers=("NCHW", "OIHW", "NCHW"))
    z = jnp.maximum(z * s2[None, :, None, None] + b2[None, :, None, None], 0.0)
    return z


def init_params(key, cin, cout):
    ks = jax.random.split(key, 8)
    return {
        # depthwise Conv2d(cin, cin, 3, groups=cin, bias=False): (cin, 1, 3, 3)
        "w_dw": 0.1 * jax.random.normal(ks[0], (cin, 1, 3, 3), jnp.float32),
        # pointwise Conv2d(cin, cout, 1, bias=False): (cout, cin, 1, 1)
        "w_pw": 0.1 * jax.random.normal(ks[1], (cout, cin, 1, 1), jnp.float32),
        # BatchNorm2d(cin) params / running stats
        "g1": 1.0 + 0.1 * jax.random.normal(ks[2], (cin,), jnp.float32),
        "be1": 0.1 * jax.random.normal(ks[3], (cin,), jnp.float32),
        "m1": 0.05 * jax.random.normal(ks[4], (cin,), jnp.float32),
        "v1": 0.5 + jax.random.uniform(ks[5], (cin,), jnp.float32),
        # BatchNorm2d(cout) params / running stats
        "g2": 1.0 + 0.1 * jax.random.normal(ks[6], (cout,), jnp.float32),
        "be2": 0.1 * jax.random.normal(ks[7], (cout,), jnp.float32),
        "m2": jnp.zeros((cout,), jnp.float32),
        "v2": jnp.ones((cout,), jnp.float32),
    }


if __name__ == "__main__":
    key = jax.random.PRNGKey(0)
    k_x, k_p = jax.random.split(key)

    N, Cin, H, W = 2, 4, 16, 16
    Cout = 8
    stride = 1

    x = jax.random.normal(k_x, (N, Cin, H, W), jnp.float32)
    params = init_params(k_p, Cin, Cout)

    ref = jax.block_until_ready(reference_forward(x, params, stride=stride))

    # f32 pointwise path: bit-close to the lax reference.  Configs exercise the
    # auto tile size, multi-tile halo stitching, ragged output-row padding and
    # the in-kernel sub-chunk (depthwise/pointwise overlap) path.
    for tr, cr in ((None, None), (4, None), (5, None), (8, 3)):
        out = jax.block_until_ready(
            depthwise_separable_conv(x, params, stride=stride, tile_rows=tr,
                                     chunk_rows=cr,
                                     pw_compute_dtype=jnp.float32))
        assert out.shape == ref.shape == (N, Cout, H // stride, W // stride)
        assert jnp.allclose(out, ref, atol=1e-4, rtol=1e-4), \
            f"f32 mismatch vs. JAX reference (tile_rows={tr}, chunk_rows={cr})"

    # Default bf16 pointwise path (native MXU dtype on v5e/v6e/v7x): the MXU is
    # fed bf16 operands with f32 accumulation, so tolerance is looser.
    out_bf16 = jax.block_until_ready(
        depthwise_separable_conv(x, params, stride=stride))
    assert out_bf16.shape == ref.shape
    assert jnp.allclose(out_bf16, ref, atol=2e-2, rtol=2e-2), \
        "bf16 pointwise path deviates too far from the f32 reference"

    print("KERNEL_OK")
</pallas_src>

<mosaic_0001>
module attributes {stable_mosaic.version = 11 : i64} {
  func.func @kernel(%arg0: i32, %arg1: i32, %arg2: memref<1x16x18x128xf32, #tpu.memory_space<vmem>>, %arg3: memref<1x1x18x128xf32, #tpu.memory_space<vmem>>, %arg4: memref<1x1x18x128xf32, #tpu.memory_space<vmem>>, %arg5: memref<3x3x128xf32, #tpu.memory_space<vmem>>, %arg6: memref<1x128xf32, #tpu.memory_space<vmem>>, %arg7: memref<128x128xf32, #tpu.memory_space<vmem>>, %arg8: memref<1x128xf32, #tpu.memory_space<vmem>>, %arg9: memref<1x16x16x128xf32, #tpu.memory_space<vmem>>) attributes {dimension_semantics = [#tpu.dimension_semantics<parallel>, #tpu.dimension_semantics<parallel>], iteration_bounds = array<i64: 2, 1>, scalar_prefetch = 0 : i64, scratch_operands = 0 : i64, tpu.core_type = #tpu.core_type<tc>, window_params = [{transform_indices = @transform_0, window_bounds = array<i64: 1, 16, 18, 128>}, {transform_indices = @transform_1, window_bounds = array<i64: 1, 1, 18, 128>}, {transform_indices = @transform_2, window_bounds = array<i64: 1, 1, 18, 128>}, {pipeline_mode = #tpu.pipeline_mode<synchronous>, transform_indices = @transform_3, window_bounds = array<i64: 3, 3, 128>}, {pipeline_mode = #tpu.pipeline_mode<synchronous>, transform_indices = @transform_4, window_bounds = array<i64: 1, 128>}, {pipeline_mode = #tpu.pipeline_mode<synchronous>, transform_indices = @transform_5, window_bounds = array<i64: 128, 128>}, {pipeline_mode = #tpu.pipeline_mode<synchronous>, transform_indices = @transform_6, window_bounds = array<i64: 1, 128>}, {transform_indices = @transform_7, window_bounds = array<i64: 1, 16, 16, 128>}]} {
    %c0 = arith.constant 0 : index
    %c0_0 = arith.constant 0 : index
    %c0_1 = arith.constant 0 : index
    %0 = vector.load %arg5[%c0, %c0_0, %c0_1] : memref<3x3x128xf32, #tpu.memory_space<vmem>>, vector<3x3x128xf32>
    %c0_2 = arith.constant 0 : index
    %c0_3 = arith.constant 0 : index
    %1 = vector.load %arg6[%c0_2, %c0_3] : memref<1x128xf32, #tpu.memory_space<vmem>>, vector<1x128xf32>
    %2 = vector.shape_cast %1 : vector<1x128xf32> to vector<128xf32>
    %c0_4 = arith.constant 0 : index
    %c0_5 = arith.constant 0 : index
    %3 = vector.load %arg8[%c0_4, %c0_5] : memref<1x128xf32, #tpu.memory_space<vmem>>, vector<1x128xf32>
    %c0_6 = arith.constant 0 : index
    %c0_7 = arith.constant 0 : index
    %c0_8 = arith.constant 0 : index
    %c0_9 = arith.constant 0 : index
    %4 = vector.load %arg2[%c0_6, %c0_7, %c0_8, %c0_9] : memref<1x16x18x128xf32, #tpu.memory_space<vmem>>, vector<1x16x16x128xf32>
    %5 = vector.shape_cast %4 : vector<1x16x16x128xf32> to vector<16x16x128xf32>
    %c0_10 = arith.constant 0 : index
    %c0_11 = arith.constant 0 : index
    %c0_12 = arith.constant 0 : index
    %c0_13 = arith.constant 0 : index
    %6 = vector.load %arg3[%c0_10, %c0_11, %c0_12, %c0_13] : memref<1x1x18x128xf32, #tpu.memory_space<vmem>>, vector<1x1x16x128xf32>
    %7 = vector.shape_cast %6 : vector<1x1x16x128xf32> to vector<1x16x128xf32>
    %c0_14 = arith.constant 0 : index
    %c0_15 = arith.constant 0 : index
    %c0_16 = arith.constant 0 : index
    %c0_17 = arith.constant 0 : index
    %8 = vector.load %arg4[%c0_14, %c0_15, %c0_16, %c0_17] : memref<1x1x18x128xf32, #tpu.memory_space<vmem>>, vector<1x1x16x128xf32>
    %9 = vector.shape_cast %8 : vector<1x1x16x128xf32> to vector<1x16x128xf32>
    %10 = tpu.concatenate %5, %7, %9 in 0 : vector<16x16x128xf32>, vector<1x16x128xf32>, vector<1x16x128xf32> -> vector<18x16x128xf32>
    %c0_18 = arith.constant 0 : index
    %c0_19 = arith.constant 0 : index
    %c1 = arith.constant 1 : index
    %c0_20 = arith.constant 0 : index
    %11 = vector.load %arg2[%c0_18, %c0_19, %c1, %c0_20] : memref<1x16x18x128xf32, #tpu.memory_space<vmem>>, vector<1x16x16x128xf32>
    %12 = vector.shape_cast %11 : vector<1x16x16x128xf32> to vector<16x16x128xf32>
    %c0_21 = arith.constant 0 : index
    %c0_22 = arith.constant 0 : index
    %c1_23 = arith.constant 1 : index
    %c0_24 = arith.constant 0 : index
    %13 = vector.load %arg3[%c0_21, %c0_22, %c1_23, %c0_24] : memref<1x1x18x128xf32, #tpu.memory_space<vmem>>, vector<1x1x16x128xf32>
    %14 = vector.shape_cast %13 : vector<1x1x16x128xf32> to vector<1x16x128xf32>
    %c0_25 = arith.constant 0 : index
    %c0_26 = arith.constant 0 : index
    %c1_27 = arith.constant 1 : index
    %c0_28 = arith.constant 0 : index
    %15 = vector.load %arg4[%c0_25, %c0_26, %c1_27, %c0_28] : memref<1x1x18x128xf32, #tpu.memory_space<vmem>>, vector<1x1x16x128xf32>
    %16 = vector.shape_cast %15 : vector<1x1x16x128xf32> to vector<1x16x128xf32>
    %17 = tpu.concatenate %12, %14, %16 in 0 : vector<16x16x128xf32>, vector<1x16x128xf32>, vector<1x16x128xf32> -> vector<18x16x128xf32>
    %c0_29 = arith.constant 0 : index
    %c0_30 = arith.constant 0 : index
    %c2 = arith.constant 2 : index
    %c0_31 = arith.constant 0 : index
    %18 = vector.load %arg2[%c0_29, %c0_30, %c2, %c0_31] : memref<1x16x18x128xf32, #tpu.memory_space<vmem>>, vector<1x16x16x128xf32>
    %19 = vector.shape_cast %18 : vector<1x16x16x128xf32> to vector<16x16x128xf32>
    %c0_32 = arith.constant 0 : index
    %c0_33 = arith.constant 0 : index
    %c2_34 = arith.constant 2 : index
    %c0_35 = arith.constant 0 : index
    %20 = vector.load %arg3[%c0_32, %c0_33, %c2_34, %c0_35] : memref<1x1x18x128xf32, #tpu.memory_space<vmem>>, vector<1x1x16x128xf32>
    %21 = vector.shape_cast %20 : vector<1x1x16x128xf32> to vector<1x16x128xf32>
    %c0_36 = arith.constant 0 : index
    %c0_37 = arith.constant 0 : index
    %c2_38 = arith.constant 2 : index
    %c0_39 = arith.constant 0 : index
    %22 = vector.load %arg4[%c0_36, %c0_37, %c2_38, %c0_39] : memref<1x1x18x128xf32, #tpu.memory_space<vmem>>, vector<1x1x16x128xf32>
    %23 = vector.shape_cast %22 : vector<1x1x16x128xf32> to vector<1x16x128xf32>
    %24 = tpu.concatenate %19, %21, %23 in 0 : vector<16x16x128xf32>, vector<1x16x128xf32>, vector<1x16x128xf32> -> vector<18x16x128xf32>
    %25 = vector.extract_strided_slice %10 {offsets = [0, 0, 0], sizes = [16, 16, 128], strides = [1, 1, 1]} : vector<18x16x128xf32> to vector<16x16x128xf32>
    %26 = vector.extract_strided_slice %0 {offsets = [0, 0, 0], sizes = [1, 1, 128], strides = [1, 1, 1]} : vector<3x3x128xf32> to vector<1x1x128xf32>
    %27 = vector.shape_cast %26 : vector<1x1x128xf32> to vector<128xf32>
    %28 = vector.shape_cast %27 : vector<128xf32> to vector<1x1x128xf32>
    %29 = vector.broadcast %28 : vector<1x1x128xf32> to vector<16x16x128xf32>
    %30 = arith.mulf %25, %29 : vector<16x16x128xf32>
    %31 = vector.extract_strided_slice %17 {offsets = [0, 0, 0], sizes = [16, 16, 128], strides = [1, 1, 1]} : vector<18x16x128xf32> to vector<16x16x128xf32>
    %32 = vector.extract_strided_slice %0 {offsets = [0, 1, 0], sizes = [1, 1, 128], strides = [1, 1, 1]} : vector<3x3x128xf32> to vector<1x1x128xf32>
    %33 = vector.shape_cast %32 : vector<1x1x128xf32> to vector<128xf32>
    %34 = vector.shape_cast %33 : vector<128xf32> to vector<1x1x128xf32>
    %35 = vector.broadcast %34 : vector<1x1x128xf32> to vector<16x16x128xf32>
    %36 = arith.mulf %31, %35 : vector<16x16x128xf32>
    %37 = arith.addf %30, %36 : vector<16x16x128xf32>
    %38 = vector.extract_strided_slice %24 {offsets = [0, 0, 0], sizes = [16, 16, 128], strides = [1, 1, 1]} : vector<18x16x128xf32> to vector<16x16x128xf32>
    %39 = vector.extract_strided_slice %0 {offsets = [0, 2, 0], sizes = [1, 1, 128], strides = [1, 1, 1]} : vector<3x3x128xf32> to vector<1x1x128xf32>
    %40 = vector.shape_cast %39 : vector<1x1x128xf32> to vector<128xf32>
    %41 = vector.shape_cast %40 : vector<128xf32> to vector<1x1x128xf32>
    %42 = vector.broadcast %41 : vector<1x1x128xf32> to vector<16x16x128xf32>
    %43 = arith.mulf %38, %42 : vector<16x16x128xf32>
    %44 = arith.addf %37, %43 : vector<16x16x128xf32>
    %45 = vector.extract_strided_slice %10 {offsets = [1, 0, 0], sizes = [16, 16, 128], strides = [1, 1, 1]} : vector<18x16x128xf32> to vector<16x16x128xf32>
    %46 = vector.extract_strided_slice %0 {offsets = [1, 0, 0], sizes = [1, 1, 128], strides = [1, 1, 1]} : vector<3x3x128xf32> to vector<1x1x128xf32>
    %47 = vector.shape_cast %46 : vector<1x1x128xf32> to vector<128xf32>
    %48 = vector.shape_cast %47 : vector<128xf32> to vector<1x1x128xf32>
    %49 = vector.broadcast %48 : vector<1x1x128xf32> to vector<16x16x128xf32>
    %50 = arith.mulf %45, %49 : vector<16x16x128xf32>
    %51 = arith.addf %44, %50 : vector<16x16x128xf32>
    %52 = vector.extract_strided_slice %17 {offsets = [1, 0, 0], sizes = [16, 16, 128], strides = [1, 1, 1]} : vector<18x16x128xf32> to vector<16x16x128xf32>
    %53 = vector.extract_strided_slice %0 {offsets = [1, 1, 0], sizes = [1, 1, 128], strides = [1, 1, 1]} : vector<3x3x128xf32> to vector<1x1x128xf32>
    %54 = vector.shape_cast %53 : vector<1x1x128xf32> to vector<128xf32>
    %55 = vector.shape_cast %54 : vector<128xf32> to vector<1x1x128xf32>
    %56 = vector.broadcast %55 : vector<1x1x128xf32> to vector<16x16x128xf32>
    %57 = arith.mulf %52, %56 : vector<16x16x128xf32>
    %58 = arith.addf %51, %57 : vector<16x16x128xf32>
    %59 = vector.extract_strided_slice %24 {offsets = [1, 0, 0], sizes = [16, 16, 128], strides = [1, 1, 1]} : vector<18x16x128xf32> to vector<16x16x128xf32>
    %60 = vector.extract_strided_slice %0 {offsets = [1, 2, 0], sizes = [1, 1, 128], strides = [1, 1, 1]} : vector<3x3x128xf32> to vector<1x1x128xf32>
    %61 = vector.shape_cast %60 : vector<1x1x128xf32> to vector<128xf32>
    %62 = vector.shape_cast %61 : vector<128xf32> to vector<1x1x128xf32>
    %63 = vector.broadcast %62 : vector<1x1x128xf32> to vector<16x16x128xf32>
    %64 = arith.mulf %59, %63 : vector<16x16x128xf32>
    %65 = arith.addf %58, %64 : vector<16x16x128xf32>
    %66 = vector.extract_strided_slice %10 {offsets = [2, 0, 0], sizes = [16, 16, 128], strides = [1, 1, 1]} : vector<18x16x128xf32> to vector<16x16x128xf32>
    %67 = vector.extract_strided_slice %0 {offsets = [2, 0, 0], sizes = [1, 1, 128], strides = [1, 1, 1]} : vector<3x3x128xf32> to vector<1x1x128xf32>
    %68 = vector.shape_cast %67 : vector<1x1x128xf32> to vector<128xf32>
    %69 = vector.shape_cast %68 : vector<128xf32> to vector<1x1x128xf32>
    %70 = vector.broadcast %69 : vector<1x1x128xf32> to vector<16x16x128xf32>
    %71 = arith.mulf %66, %70 : vector<16x16x128xf32>
    %72 = arith.addf %65, %71 : vector<16x16x128xf32>
    %73 = vector.extract_strided_slice %17 {offsets = [2, 0, 0], sizes = [16, 16, 128], strides = [1, 1, 1]} : vector<18x16x128xf32> to vector<16x16x128xf32>
    %74 = vector.extract_strided_slice %0 {offsets = [2, 1, 0], sizes = [1, 1, 128], strides = [1, 1, 1]} : vector<3x3x128xf32> to vector<1x1x128xf32>
    %75 = vector.shape_cast %74 : vector<1x1x128xf32> to vector<128xf32>
    %76 = vector.shape_cast %75 : vector<128xf32> to vector<1x1x128xf32>
    %77 = vector.broadcast %76 : vector<1x1x128xf32> to vector<16x16x128xf32>
    %78 = arith.mulf %73, %77 : vector<16x16x128xf32>
    %79 = arith.addf %72, %78 : vector<16x16x128xf32>
    %80 = vector.extract_strided_slice %24 {offsets = [2, 0, 0], sizes = [16, 16, 128], strides = [1, 1, 1]} : vector<18x16x128xf32> to vector<16x16x128xf32>
    %81 = vector.extract_strided_slice %0 {offsets = [2, 2, 0], sizes = [1, 1, 128], strides = [1, 1, 1]} : vector<3x3x128xf32> to vector<1x1x128xf32>
    %82 = vector.shape_cast %81 : vector<1x1x128xf32> to vector<128xf32>
    %83 = vector.shape_cast %82 : vector<128xf32> to vector<1x1x128xf32>
    %84 = vector.broadcast %83 : vector<1x1x128xf32> to vector<16x16x128xf32>
    %85 = arith.mulf %80, %84 : vector<16x16x128xf32>
    %86 = arith.addf %79, %85 : vector<16x16x128xf32>
    %87 = vector.shape_cast %2 : vector<128xf32> to vector<1x1x128xf32>
    %88 = vector.broadcast %87 : vector<1x1x128xf32> to vector<16x16x128xf32>
    %89 = arith.addf %86, %88 : vector<16x16x128xf32>
    %cst = arith.constant 0.000000e+00 : f32
    %90 = vector.broadcast %cst : f32 to vector<16x16x128xf32>
    %91 = arith.maximumf %89, %90 : vector<16x16x128xf32>
    %92 = vector.shape_cast %91 : vector<16x16x128xf32> to vector<256x128xf32>
    %c0_40 = arith.constant 0 : index
    %c0_41 = arith.constant 0 : index
    %93 = vector.load %arg7[%c0_40, %c0_41] : memref<128x128xf32, #tpu.memory_space<vmem>>, vector<128x128xf32>
    %cst_42 = arith.constant dense<0.000000e+00> : vector<256x128xf32>
    %94 = tpu.matmul %92, %93, %cst_42 {dimension_numbers = #tpu.dot_dimension_numbers<[1], [0], [0], [1], [0, 0, 1, 1], [], []>} : vector<256x128xf32>, vector<128x128xf32>, vector<256x128xf32> -> vector<256x128xf32>
    %95 = vector.broadcast %3 : vector<1x128xf32> to vector<256x128xf32>
    %96 = arith.addf %94, %95 : vector<256x128xf32>
    %cst_43 = arith.constant 0.000000e+00 : f32
    %97 = vector.broadcast %cst_43 : f32 to vector<256x128xf32>
    %98 = arith.maximumf %96, %97 : vector<256x128xf32>
    %99 = vector.shape_cast %98 : vector<256x128xf32> to vector<16x16x128xf32>
    %c0_44 = arith.constant 0 : index
    %c0_45 = arith.constant 0 : index
    %c0_46 = arith.constant 0 : index
    %c0_47 = arith.constant 0 : index
    %100 = vector.load %arg9[%c0_44, %c0_45, %c0_46, %c0_47] : memref<1x16x16x128xf32, #tpu.memory_space<vmem>>, vector<1x16x16x128xf32>
    %101 = vector.shape_cast %100 : vector<1x16x16x128xf32> to vector<16x16x128xf32>
    %102 = vector.shape_cast %99 : vector<16x16x128xf32> to vector<1x16x16x128xf32>
    tpu.vector_store %arg9[%c0_44, %c0_45, %c0_46, %c0_47], %102 {strides = array<i32>} : memref<1x16x16x128xf32, #tpu.memory_space<vmem>>, vector<1x16x16x128xf32>,
    return
  }
  func.func @transform_0(%arg0: i32, %arg1: i32) -> (i32, i32, i32, i32) {
    %c0_i32 = arith.constant 0 : i32
    %c0_i32_0 = arith.constant 0 : i32
    %c0_i32_1 = arith.constant 0 : i32
    return %arg0, %arg1, %c0_i32, %c0_i32_0 : i32, i32, i32, i32
  }
  func.func @transform_1(%arg0: i32, %arg1: i32) -> (i32, i32, i32, i32) {
    %c1_i32 = arith.constant 1 : i32
    %0 = arith.addi %arg1, %c1_i32 : i32
    %c16_i32 = arith.constant 16 : i32
    %1 = arith.muli %0, %c16_i32 : i32
    %c0_i32 = arith.constant 0 : i32
    %2 = arith.addi %1, %c0_i32 : i32
    %c0_i32_0 = arith.constant 0 : i32
    %c0_i32_1 = arith.constant 0 : i32
    %c0_i32_2 = arith.constant 0 : i32
    return %arg0, %2, %c0_i32_0, %c0_i32_1 : i32, i32, i32, i32
  }
  func.func @transform_2(%arg0: i32, %arg1: i32) -> (i32, i32, i32, i32) {
    %c1_i32 = arith.constant 1 : i32
    %0 = arith.addi %arg1, %c1_i32 : i32
    %c16_i32 = arith.constant 16 : i32
    %1 = arith.muli %0, %c16_i32 : i32
    %c1_i32_0 = arith.constant 1 : i32
    %2 = arith.addi %1, %c1_i32_0 : i32
    %c0_i32 = arith.constant 0 : i32
    %c0_i32_1 = arith.constant 0 : i32
    %c0_i32_2 = arith.constant 0 : i32
    return %arg0, %2, %c0_i32, %c0_i32_1 : i32, i32, i32, i32
  }
  func.func @transform_3(%arg0: i32, %arg1: i32) -> (i32, i32, i32) {
    %c0_i32 = arith.constant 0 : i32
    %c0_i32_0 = arith.constant 0 : i32
    %c0_i32_1 = arith.constant 0 : i32
    %c0_i32_2 = arith.constant 0 : i32
    return %c0_i32, %c0_i32_0, %c0_i32_1 : i32, i32, i32
  }
  func.func @transform_4(%arg0: i32, %arg1: i32) -> (i32, i32) {
    %c0_i32 = arith.constant 0 : i32
    %c0_i32_0 = arith.constant 0 : i32
    %c0_i32_1 = arith.constant 0 : i32
    return %c0_i32, %c0_i32_0 : i32, i32
  }
  func.func @transform_5(%arg0: i32, %arg1: i32) -> (i32, i32) {
    %c0_i32 = arith.constant 0 : i32
    %c0_i32_0 = arith.constant 0 : i32
    %c0_i32_1 = arith.constant 0 : i32
    return %c0_i32, %c0_i32_0 : i32, i32
  }
  func.func @transform_6(%arg0: i32, %arg1: i32) -> (i32, i32) {
    %c0_i32 = arith.constant 0 : i32
    %c0_i32_0 = arith.constant 0 : i32
    %c0_i32_1 = arith.constant 0 : i32
    return %c0_i32, %c0_i32_0 : i32, i32
  }
  func.func @transform_7(%arg0: i32, %arg1: i32) -> (i32, i32, i32, i32) {
    %c0_i32 = arith.constant 0 : i32
    %c0_i32_0 = arith.constant 0 : i32
    %c0_i32_1 = arith.constant 0 : i32
    return %arg0, %arg1, %c0_i32, %c0_i32_0 : i32, i32, i32, i32
  }
}

</mosaic_0001>

<llo_original>
// kernel: tpu_custom_call.1
$region0: #{tpu_custom_call.1}
  #allocation0 [shape = 'u32[]', space=smem, size = 0x4, offset = 0x4, fixed_abs, tag = 'smem constant byte address 0x4 - core index']
  #allocation1 [shape = 'u32[72,128]{1,0:T(1,128)}', space=vmem, size = 0x9000, scoped, tag = 'internal scratch']
  %s0 = inlined_call_operand.vmem [shape: f32[2,18,18,128], index: 0, kind: input, shape index: {}]
  %s1 = inlined_call_operand.vmem [shape: f32[2,18,18,128], index: 1, kind: input, shape index: {}]
  %s2 = inlined_call_operand.vmem [shape: f32[2,18,18,128], index: 2, kind: input, shape index: {}]
  %s3 = inlined_call_operand.vmem [shape: f32[3,3,128], index: 3, kind: input, shape index: {}]
  %s4 = inlined_call_operand.vmem [shape: f32[1,128], index: 4, kind: input, shape index: {}]
  %s5 = inlined_call_operand.vmem [shape: f32[128,128], index: 5, kind: input, shape index: {}]
  %s6 = inlined_call_operand.vmem [shape: f32[1,128], index: 6, kind: input, shape index: {}]
  %s7 = inlined_call_operand.hbm [shape: f32[2,16,16,128], index: 7, kind: output, shape index: {}]
  %s8 = sld [smem:[#allocation0]]
  $region61: #{tpu_custom_call.1} parent=0
    _
  %s10 = ssub.s32 1, %s8
  %s11 = scalar_select 0, %s10, %s8
  $region1: #{tpu_custom_call.1} parent=0
    #allocation2 [shape = 'u8[262144]{0}', space=vmem, size = 0x40000, scoped, tag = 'output window, operand 0']
    #allocation3 [shape = 's32[2]{0}', space=sflag, size = 0x8, scoped, tag = 'scoped memory for tpu_custom_call.1']
    %12 = vsyncpa [#allocation3], 0
    %s13 = scalar_lea.sflag [#allocation3], 1
    %14 = vsyncpa %s13, 0
    loop: start=0, step=1, limit=4
    $region2: #{tpu_custom_call.1} parent=1 // loop_pre_header
      _
    $region3: #{tpu_custom_call.1} parent=1 // loop_header
      %s16 = sphi 0, %s20
      %p17 = scmp.ge.s32.totalorder %s16, 4
      %s23 = sphi 0, %s35
      %s24 = sphi 0, %s31
      %s25 = sphi 0, %s23
      %s26 = sphi 0, %s24
      %s27 = sphi 0, %s25
      %s28 = sphi 0, %s26
      %s40 = sphi 0, %s42
      %s43 = sphi 0, %s40
      %s44 = sphi 0, %s43
      %s60 = sphi 0, %s44
      %s72 = sphi 0, %s74
      %s75 = sphi 0, %s72
      %s76 = sphi 0, %s75
      %s92 = sphi 0, %s76
      %s106 = sphi 0, %s108
      %s109 = sphi 0, %s106
      %s110 = sphi 0, %s109
      %s126 = sphi 0, %s110
      %s130 = sphi 0, %s130
      %s132 = sphi 0, %s130
      %s133 = sphi 0, %s132
      %s147 = sphi 0, %s133
      %s151 = sphi 0, %s151
      %s153 = sphi 0, %s151
      %s154 = sphi 0, %s153
      %s168 = sphi 0, %s154
      %s172 = sphi 0, %s172
      %s174 = sphi 0, %s172
      %s175 = sphi 0, %s174
      %s189 = sphi 0, %s175
      %s193 = sphi 0, %s193
      %s195 = sphi 0, %s193
      %s196 = sphi 0, %s195
      %s210 = sphi 0, %s196
      %s218 = sphi 0, %s220
      %s221 = sphi 0, %s218
      %s222 = sphi 0, %s221
      %s238 = sphi 0, %s222
    $region4: #{tpu_custom_call.1} parent=1 // loop_header_branch
      %19 = sbr.rel (%p17) target = $region8
    $region5: #{tpu_custom_call.1} parent=1 // loop_body
      %s21 = ssub.s32 %s16, 1
      %s22 = ssub.s32 %s16, 2
      %s29 = sadd.s32 1, %s24
      %p30 = scmp.ge.s32.totalorder %s29, 1
      %s31 = scalar_select %p30, 0, %s29
      %s32 = sadd.s32 1, %s23
      %s33 = scalar_select %p30, %s32, %s23
      %p34 = scmp.ge.s32.totalorder %s33, 2
      %s35 = scalar_select %p34, 0, %s33
      %s36 = ssub.s32 %s23, %s35
      %s37 = ssub.s32 %s24, %s31
      %s38 = sor.u32 %s36, %s37
      %p39 = scmp.eq.s32.totalorder %s38, 0
      %s41 = sadd.s32 %s40, 1
      %s42 = scalar_select %p39, %s40, %s41
      %p45 = pneg %p39
      %p46 = scmp.eq.s32.totalorder %s16, 1
      %p47 = por %p45, %p46
      %p48 = scmp.ne.s32.totalorder %s40, %s43
      %p49 = scmp.eq.s32.totalorder %s16, 0
      %p50 = por %p48, %p49
      %p51 = scmp.ne.s32.totalorder %s40, %s43
      %p52 = scmp.eq.s32.totalorder %s21, 1
      %p53 = por %p51, %p52
      %p54 = scmp.ne.s32.totalorder %s43, %s44
      %p55 = scmp.eq.s32.totalorder %s21, 0
      %p56 = por %p54, %p55
      %p57 = scmp.ne.s32.totalorder %s43, %s44
      %p58 = scmp.eq.s32.totalorder %s22, 1
      %p59 = por %p57, %p58
      %p61 = scmp.ne.s32.totalorder %s44, %s60
      %p62 = scmp.eq.s32.totalorder %s22, 0
      %p63 = por %p61, %p62
      %s64 = sadd.s32 %s24, 1
      %s65 = smul.u32 %s64, 16
      %s66 = sadd.s32 %s31, 1
      %s67 = smul.u32 %s66, 16
      %s68 = ssub.s32 %s23, %s35
      %s69 = ssub.s32 %s65, %s67
      %s70 = sor.u32 %s68, %s69
      %p71 = scmp.eq.s32.totalorder %s70, 0
      %s73 = sadd.s32 %s72, 1
      %s74 = scalar_select %p71, %s72, %s73
      %p77 = pneg %p71
      %p78 = scmp.eq.s32.totalorder %s16, 1
      %p79 = por %p77, %p78
      %p80 = scmp.ne.s32.totalorder %s72, %s75
      %p81 = scmp.eq.s32.totalorder %s16, 0
      %p82 = por %p80, %p81
      %p83 = scmp.ne.s32.totalorder %s72, %s75
      %p84 = scmp.eq.s32.totalorder %s21, 1
      %p85 = por %p83, %p84
      %p86 = scmp.ne.s32.totalorder %s75, %s76
      %p87 = scmp.eq.s32.totalorder %s21, 0
      %p88 = por %p86, %p87
      %p89 = scmp.ne.s32.totalorder %s75, %s76
      %p90 = scmp.eq.s32.totalorder %s22, 1
      %p91 = por %p89, %p90
      %p93 = scmp.ne.s32.totalorder %s76, %s92
      %p94 = scmp.eq.s32.totalorder %s22, 0
      %p95 = por %p93, %p94
      %s96 = sadd.s32 %s24, 1
      %s97 = smul.u32 %s96, 16
      %s98 = sadd.s32 %s97, 1
      %s99 = sadd.s32 %s31, 1
      %s100 = smul.u32 %s99, 16
      %s101 = sadd.s32 %s100, 1
      %s102 = ssub.s32 %s23, %s35
      %s103 = ssub.s32 %s98, %s101
      %s104 = sor.u32 %s102, %s103
      %p105 = scmp.eq.s32.totalorder %s104, 0
      %s107 = sadd.s32 %s106, 1
      %s108 = scalar_select %p105, %s106, %s107
      %p111 = pneg %p105
      %p112 = scmp.eq.s32.totalorder %s16, 1
      %p113 = por %p111, %p112
      %p114 = scmp.ne.s32.totalorder %s106, %s109
      %p115 = scmp.eq.s32.totalorder %s16, 0
      %p116 = por %p114, %p115
      %p117 = scmp.ne.s32.totalorder %s106, %s109
      %p118 = scmp.eq.s32.totalorder %s21, 1
      %p119 = por %p117, %p118
      %p120 = scmp.ne.s32.totalorder %s109, %s110
      %p121 = scmp.eq.s32.totalorder %s21, 0
      %p122 = por %p120, %p121
      %p123 = scmp.ne.s32.totalorder %s109, %s110
      %p124 = scmp.eq.s32.totalorder %s22, 1
      %p125 = por %p123, %p124
      %p127 = scmp.ne.s32.totalorder %s110, %s126
      %p128 = scmp.eq.s32.totalorder %s22, 0
      %p129 = por %p127, %p128
      %s131 = sadd.s32 %s130, 1
      %p134 = scmp.eq.s32.totalorder %s16, 1
      %p135 = scmp.ne.s32.totalorder %s130, %s132
      %p136 = scmp.eq.s32.totalorder %s16, 0
      %p137 = por %p135, %p136
      %p138 = scmp.ne.s32.totalorder %s130, %s132
      %p139 = scmp.eq.s32.totalorder %s21, 1
      %p140 = por %p138, %p139
      %p141 = scmp.ne.s32.totalorder %s132, %s133
      %p142 = scmp.eq.s32.totalorder %s21, 0
      %p143 = por %p141, %p142
      %p144 = scmp.ne.s32.totalorder %s132, %s133
      %p145 = scmp.eq.s32.totalorder %s22, 1
      %p146 = por %p144, %p145
      %p148 = scmp.ne.s32.totalorder %s133, %s147
      %p149 = scmp.eq.s32.totalorder %s22, 0
      %p150 = por %p148, %p149
      %s152 = sadd.s32 %s151, 1
      %p155 = scmp.eq.s32.totalorder %s16, 1
      %p156 = scmp.ne.s32.totalorder %s151, %s153
      %p157 = scmp.eq.s32.totalorder %s16, 0
      %p158 = por %p156, %p157
      %p159 = scmp.ne.s32.totalorder %s151, %s153
      %p160 = scmp.eq.s32.totalorder %s21, 1
      %p161 = por %p159, %p160
      %p162 = scmp.ne.s32.totalorder %s153, %s154
      %p163 = scmp.eq.s32.totalorder %s21, 0
      %p164 = por %p162, %p163
      %p165 = scmp.ne.s32.totalorder %s153, %s154
      %p166 = scmp.eq.s32.totalorder %s22, 1
      %p167 = por %p165, %p166
      %p169 = scmp.ne.s32.totalorder %s154, %s168
      %p170 = scmp.eq.s32.totalorder %s22, 0
      %p171 = por %p169, %p170
      %s173 = sadd.s32 %s172, 1
      %p176 = scmp.eq.s32.totalorder %s16, 1
      %p177 = scmp.ne.s32.totalorder %s172, %s174
      %p178 = scmp.eq.s32.totalorder %s16, 0
      %p179 = por %p177, %p178
      %p180 = scmp.ne.s32.totalorder %s172, %s174
      %p181 = scmp.eq.s32.totalorder %s21, 1
      %p182 = por %p180, %p181
      %p183 = scmp.ne.s32.totalorder %s174, %s175
      %p184 = scmp.eq.s32.totalorder %s21, 0
      %p185 = por %p183, %p184
      %p186 = scmp.ne.s32.totalorder %s174, %s175
      %p187 = scmp.eq.s32.totalorder %s22, 1
      %p188 = por %p186, %p187
      %p190 = scmp.ne.s32.totalorder %s175, %s189
      %p191 = scmp.eq.s32.totalorder %s22, 0
      %p192 = por %p190, %p191
      %s194 = sadd.s32 %s193, 1
      %p197 = scmp.eq.s32.totalorder %s16, 1
      %p198 = scmp.ne.s32.totalorder %s193, %s195
      %p199 = scmp.eq.s32.totalorder %s16, 0
      %p200 = por %p198, %p199
      %p201 = scmp.ne.s32.totalorder %s193, %s195
      %p202 = scmp.eq.s32.totalorder %s21, 1
      %p203 = por %p201, %p202
      %p204 = scmp.ne.s32.totalorder %s195, %s196
      %p205 = scmp.eq.s32.totalorder %s21, 0
      %p206 = por %p204, %p205
      %p207 = scmp.ne.s32.totalorder %s195, %s196
      %p208 = scmp.eq.s32.totalorder %s22, 1
      %p209 = por %p207, %p208
      %p211 = scmp.ne.s32.totalorder %s196, %s210
      %p212 = scmp.eq.s32.totalorder %s22, 0
      %p213 = por %p211, %p212
      %s214 = ssub.s32 %s23, %s35
      %s215 = ssub.s32 %s24, %s31
      %s216 = sor.u32 %s214, %s215
      %p217 = scmp.eq.s32.totalorder %s216, 0
      %s219 = sadd.s32 %s218, 1
      %s220 = scalar_select %p217, %s218, %s219
      %p223 = pneg %p217
      %p224 = scmp.eq.s32.totalorder %s16, 1
      %p225 = por %p223, %p224
      %p226 = scmp.ne.s32.totalorder %s218, %s221
      %p227 = scmp.eq.s32.totalorder %s16, 0
      %p228 = por %p226, %p227
      %p229 = scmp.ne.s32.totalorder %s218, %s221
      %p230 = scmp.eq.s32.totalorder %s21, 1
      %p231 = por %p229, %p230
      %p232 = scmp.ne.s32.totalorder %s221, %s222
      %p233 = scmp.eq.s32.totalorder %s21, 0
      %p234 = por %p232, %p233
      %p235 = scmp.ne.s32.totalorder %s221, %s222
      %p236 = scmp.eq.s32.totalorder %s22, 1
      %p237 = por %p235, %p236
      %p239 = scmp.ne.s32.totalorder %s222, %s238
      %p240 = scmp.eq.s32.totalorder %s22, 0
      %p241 = por %p239, %p240
      %p242 = scmp.le.s32.totalorder 1, %s16
      %p243 = scmp.lt.s32.totalorder %s16, 3
      %p244 = pnand %p242, %p243
      %p245 = pneg %p244
      // Predicated region
      $region9: #{tpu_custom_call.1} parent=5 // pred_check
        _
      $region10: #{tpu_custom_call.1} parent=5 // pred_check_branch
        %247 = sbr.rel (%p244) target = $region12
      $region11: #{tpu_custom_call.1} parent=5 // pred_region
        %s248 = ssub.s32 %s16, 1
        // Predicated region
        $region13: #{tpu_custom_call.1} parent=11 // pred_check
          %p249 = pneg %p143
        $region14: #{tpu_custom_call.1} parent=11 // pred_check_branch
          %251 = sbr.rel (%p249) target = $region16
        $region15: #{tpu_custom_call.1} parent=11 // pred_region
          _
        $region16: #{tpu_custom_call.1} parent=11 // pred_fallthru
          _
        // Predicated region
        $region17: #{tpu_custom_call.1} parent=11 // pred_check
          %p252 = pneg %p164
        $region18: #{tpu_custom_call.1} parent=11 // pred_check_branch
          %254 = sbr.rel (%p252) target = $region20
        $region19: #{tpu_custom_call.1} parent=11 // pred_region
          _
        $region20: #{tpu_custom_call.1} parent=11 // pred_fallthru
          _
        // Predicated region
        $region21: #{tpu_custom_call.1} parent=11 // pred_check
          %p255 = pneg %p185
        $region22: #{tpu_custom_call.1} parent=11 // pred_check_branch
          %257 = sbr.rel (%p255) target = $region24
        $region23: #{tpu_custom_call.1} parent=11 // pred_region
          _
        $region24: #{tpu_custom_call.1} parent=11 // pred_fallthru
          _
        // Predicated region
        $region25: #{tpu_custom_call.1} parent=11 // pred_check
          %p258 = pneg %p206
        $region26: #{tpu_custom_call.1} parent=11 // pred_check_branch
          %260 = sbr.rel (%p258) target = $region28
        $region27: #{tpu_custom_call.1} parent=11 // pred_region
          _
        $region28: #{tpu_custom_call.1} parent=11 // pred_fallthru
          _
      $region12: #{tpu_custom_call.1} parent=5 // pred_fallthru
        _
      %p261 = scmp.lt.s32.totalorder %s16, 2
      // Predicated region
      $region29: #{tpu_custom_call.1} parent=5 // pred_check
        %p262 = pneg %p261
      $region30: #{tpu_custom_call.1} parent=5 // pred_check_branch
        %264 = sbr.rel (%p262) target = $region32
      $region31: #{tpu_custom_call.1} parent=5 // pred_region
        // Predicated region
        $region33: #{tpu_custom_call.1} parent=31 // pred_check
          %p265 = pneg %p50
        $region34: #{tpu_custom_call.1} parent=31 // pred_check_branch
          %267 = sbr.rel (%p265) target = $region36
        $region35: #{tpu_custom_call.1} parent=31 // pred_region
          %s268 = smul.u32 16, %s24
          %s269 = ssub.s32 18, %s268
          %p270 = scmp.lt.s32.totalorder %s269, 16
          %s271 = scalar_select %p270, %s269, 16
          %s272 = smul.u32 8, %s271
          %s273 = smul.u32 %s272, 3
          %p274 = scmp.lt.s32.totalorder %s23, 1
          %s275 = scalar_select %p274, %s23, 1
          %p276 = scmp.lt.s32.totalorder %s268, 17
          %s277 = scalar_select %p276, %s268, 17
          %s278 = smul.addr %s277, 3
          %s279 = smul.addr %s275, 54
          %s280 = sadd.s32 %s278, %s279
          %s281 = smul.addr %s280, 8
          %s282 = scalar_lea.vmem %s0, %s281
          %s283 = smul.u32 16, %s24
          %s284 = ssub.s32 18, %s283
          %p285 = scmp.lt.s32.totalorder %s284, 16
          %s286 = scalar_select %p285, %s284, 16
          %s287 = smul.u32 8, %s286
          %s288 = smul.u32 %s287, 3
        $region36: #{tpu_custom_call.1} parent=31 // pred_fallthru
          _
        // Predicated region
        $region37: #{tpu_custom_call.1} parent=31 // pred_check
          %p289 = pneg %p82
        $region38: #{tpu_custom_call.1} parent=31 // pred_check_branch
          %291 = sbr.rel (%p289) target = $region40
        $region39: #{tpu_custom_call.1} parent=31 // pred_region
          %s292 = sadd.s32 %s24, 1
          %s293 = smul.u32 %s292, 16
          %p294 = scmp.lt.s32.totalorder %s23, 1
          %s295 = scalar_select %p294, %s23, 1
          %p296 = scmp.lt.s32.totalorder %s293, 17
          %s297 = scalar_select %p296, %s293, 17
          %s298 = smul.addr %s297, 3
          %s299 = smul.addr %s295, 54
          %s300 = sadd.s32 %s298, %s299
          %s301 = smul.addr %s300, 8
          %s302 = scalar_lea.vmem %s1, %s301
          %s303 = sadd.s32 %s24, 1
          %s304 = smul.u32 %s303, 16
        $region40: #{tpu_custom_call.1} parent=31 // pred_fallthru
          _
        // Predicated region
        $region41: #{tpu_custom_call.1} parent=31 // pred_check
          %p305 = pneg %p116
        $region42: #{tpu_custom_call.1} parent=31 // pred_check_branch
          %307 = sbr.rel (%p305) target = $region44
        $region43: #{tpu_custom_call.1} parent=31 // pred_region
          %s308 = sadd.s32 %s24, 1
          %s309 = smul.u32 %s308, 16
          %s310 = sadd.s32 %s309, 1
          %p311 = scmp.lt.s32.totalorder %s23, 1
          %s312 = scalar_select %p311, %s23, 1
          %p313 = scmp.lt.s32.totalorder %s310, 17
          %s314 = scalar_select %p313, %s310, 17
          %s315 = smul.addr %s314, 3
          %s316 = smul.addr %s312, 54
          %s317 = sadd.s32 %s315, %s316
          %s318 = smul.addr %s317, 8
          %s319 = scalar_lea.vmem %s2, %s318
          %s320 = sadd.s32 %s24, 1
          %s321 = smul.u32 %s320, 16
          %s322 = sadd.s32 %s321, 1
        $region44: #{tpu_custom_call.1} parent=31 // pred_fallthru
          _
      $region32: #{tpu_custom_call.1} parent=5 // pred_fallthru
        _
      %p323 = scmp.le.s32.totalorder 1, %s16
      %p324 = scmp.lt.s32.totalorder %s16, 3
      %p325 = pnand %p323, %p324
      %p326 = pneg %p325
      // Predicated region
      $region45: #{tpu_custom_call.1} parent=5 // pred_check
        _
      $region46: #{tpu_custom_call.1} parent=5 // pred_check_branch
        %328 = sbr.rel (%p325) target = $region48
      $region47: #{tpu_custom_call.1} parent=5 // pred_region
        %s329 = ssub.s32 %s16, 1
        %s330 = smul.u32 16, %s26
        %s331 = ssub.s32 18, %s330
        %p332 = scmp.lt.s32.totalorder %s331, 16
        %s333 = scalar_select %p332, %s331, 16
        %s334 = smul.u32 8, %s333
        %s335 = smul.u32 %s334, 3
        %p336 = scmp.lt.s32.totalorder %s25, 1
        %s337 = scalar_select %p336, %s25, 1
        %p338 = scmp.lt.s32.totalorder %s330, 17
        %s339 = scalar_select %p338, %s330, 17
        %s340 = smul.addr %s339, 3
        %s341 = smul.addr %s337, 54
        %s342 = sadd.s32 %s340, %s341
        %s343 = smul.addr %s342, 8
        %s344 = scalar_lea.vmem %s0, %s343
        %p345 = pneg %p56
        %p346 = pneg %p53
        %s347 = sadd.s32 %s26, 1
        %s348 = smul.u32 %s347, 16
        %p349 = scmp.lt.s32.totalorder %s25, 1
        %s350 = scalar_select %p349, %s25, 1
        %p351 = scmp.lt.s32.totalorder %s348, 17
        %s352 = scalar_select %p351, %s348, 17
        %s353 = smul.addr %s352, 3
        %s354 = smul.addr %s350, 54
        %s355 = sadd.s32 %s353, %s354
        %s356 = smul.addr %s355, 8
        %s357 = scalar_lea.vmem %s1, %s356
        %p358 = pneg %p88
        %p359 = pneg %p85
        %s360 = sadd.s32 %s26, 1
        %s361 = smul.u32 %s360, 16
        %s362 = sadd.s32 %s361, 1
        %p363 = scmp.lt.s32.totalorder %s25, 1
        %s364 = scalar_select %p363, %s25, 1
        %p365 = scmp.lt.s32.totalorder %s362, 17
        %s366 = scalar_select %p365, %s362, 17
        %s367 = smul.addr %s366, 3
        %s368 = smul.addr %s364, 54
        %s369 = sadd.s32 %s367, %s368
        %s370 = smul.addr %s369, 8
        %s371 = scalar_lea.vmem %s2, %s370
        %p372 = pneg %p122
        %p373 = pneg %p119
        %p374 = pneg %p143
        %p375 = pneg %p140
        %p376 = pneg %p164
        %p377 = pneg %p161
        %p378 = pneg %p185
        %p379 = pneg %p182
        %p380 = pneg %p206
        %p381 = pneg %p203
        %p382 = pneg %p234
        %p383 = pneg %p231
        %s384 = sand.u32 %s221, 1
        %s385 = scalar_lea.sflag [#allocation3], %s384
        %s386 = sand.u32 %s221, 1
        %s387 = smul.addr %s386, 256
        %s388 = scalar_lea.vmem [#allocation2], %s387
        %s389 = smul.u32 16, %s26
        %s390 = ssub.s32 18, %s389
        %p391 = scmp.lt.s32.totalorder %s390, 16
        %s392 = scalar_select %p391, %s390, 16
        %s393 = smul.u32 8, %s392
        %s394 = smul.u32 %s393, 3
        %p395 = scmp.lt.s32.totalorder %s25, 1
        %s396 = scalar_select %p395, %s25, 1
        %p397 = scmp.lt.s32.totalorder %s389, 17
        %s398 = scalar_select %p397, %s389, 17
        %s399 = smul.addr %s398, 3
        %s400 = smul.addr %s396, 54
        %s401 = sadd.s32 %s399, %s400
        %s402 = smul.addr %s401, 8
        %s403 = scalar_lea.vmem %s0, %s402
        %s404 = smul.u32 16, %s26
        %s405 = ssub.s32 18, %s404
        %p406 = scmp.lt.s32.totalorder %s405, 16
        %s407 = scalar_select %p406, %s405, 16
        %s408 = smul.u32 8, %s407
        %s409 = smul.u32 %s408, 3
        %s410 = sadd.s32 %s26, 1
        %s411 = smul.u32 %s410, 16
        %p412 = scmp.lt.s32.totalorder %s25, 1
        %s413 = scalar_select %p412, %s25, 1
        %p414 = scmp.lt.s32.totalorder %s411, 17
        %s415 = scalar_select %p414, %s411, 17
        %s416 = smul.addr %s415, 3
        %s417 = smul.addr %s413, 54
        %s418 = sadd.s32 %s416, %s417
        %s419 = smul.addr %s418, 8
        %s420 = scalar_lea.vmem %s1, %s419
        %s421 = sadd.s32 %s26, 1
        %s422 = smul.u32 %s421, 16
        %s423 = sadd.s32 %s26, 1
        %s424 = smul.u32 %s423, 16
        %s425 = sadd.s32 %s424, 1
        %p426 = scmp.lt.s32.totalorder %s25, 1
        %s427 = scalar_select %p426, %s25, 1
        %p428 = scmp.lt.s32.totalorder %s425, 17
        %s429 = scalar_select %p428, %s425, 17
        %s430 = smul.addr %s429, 3
        %s431 = smul.addr %s427, 54
        %s432 = sadd.s32 %s430, %s431
        %s433 = smul.addr %s432, 8
        %s434 = scalar_lea.vmem %s2, %s433
        %s435 = sadd.s32 %s26, 1
        %s436 = smul.u32 %s435, 16
        %s437 = sadd.s32 %s436, 1
        %s438 = smul.u32 16, %s26
        %v439 = vld [vmem:[%s3] sm:$0x7]
        %v440 = vld [vmem:[%s3 + $0x4] sm:$0x7]
        %v441 = vld [vmem:[%s3 + $0x8] sm:$0x7]
        %v442 = vld [vmem:[%s4] sm:$0x1]
        %v443 = vld [vmem:[%s6] sm:$0x1]
        %v444 = vld [vmem:[%s403] sm:$0xff]
        %v445 = vld [vmem:[%s403 + $0x8] sm:$0xff]
        %v446 = vld [vmem:[%s403 + $0x18] sm:$0xff]
        %v447 = vld [vmem:[%s403 + $0x20] sm:$0xff]
        %v448 = vld [vmem:[%s403 + $0x30] sm:$0xff]
        %v449 = vld [vmem:[%s403 + $0x38] sm:$0xff]
        %v450 = vld [vmem:[%s403 + $0x48] sm:$0xff]
        %v451 = vld [vmem:[%s403 + $0x50] sm:$0xff]
        %v452 = vld [vmem:[%s403 + $0x60] sm:$0xff]
        %v453 = vld [vmem:[%s403 + $0x68] sm:$0xff]
        %v454 = vld [vmem:[%s403 + $0x78] sm:$0xff]
        %v455 = vld [vmem:[%s403 + $0x80] sm:$0xff]
        %v456 = vld [vmem:[%s403 + $0x90] sm:$0xff]
        %v457 = vld [vmem:[%s403 + $0x98] sm:$0xff]
        %v458 = vld [vmem:[%s403 + $0xa8] sm:$0xff]
        %v459 = vld [vmem:[%s403 + $0xb0] sm:$0xff]
        %v460 = vld [vmem:[%s403 + $0xc0] sm:$0xff]
        %v461 = vld [vmem:[%s403 + $0xc8] sm:$0xff]
        %v462 = vld [vmem:[%s403 + $0xd8] sm:$0xff]
        %v463 = vld [vmem:[%s403 + $0xe0] sm:$0xff]
        %v464 = vld [vmem:[%s403 + $0xf0] sm:$0xff]
        %v465 = vld [vmem:[%s403 + $0xf8] sm:$0xff]
        %v466 = vld [vmem:[%s403 + $0x108] sm:$0xff]
        %v467 = vld [vmem:[%s403 + $0x110] sm:$0xff]
        %v468 = vld [vmem:[%s403 + $0x120] sm:$0xff]
        %v469 = vld [vmem:[%s403 + $0x128] sm:$0xff]
        %v470 = vld [vmem:[%s403 + $0x138] sm:$0xff]
        %v471 = vld [vmem:[%s403 + $0x140] sm:$0xff]
        %v472 = vld [vmem:[%s403 + $0x150] sm:$0xff]
        %v473 = vld [vmem:[%s403 + $0x158] sm:$0xff]
        %v474 = vld [vmem:[%s403 + $0x168] sm:$0xff]
        %v475 = vld [vmem:[%s403 + $0x170] sm:$0xff]
        %v476 = vld [vmem:[%s420] sm:$0xff]
        %v477 = vld [vmem:[%s420 + $0x8] sm:$0xff]
        %v478 = vld [vmem:[%s434] sm:$0xff]
        %v479 = vld [vmem:[%s434 + $0x8] sm:$0xff]
        %v480 = vld [vmem:[%s403 + $0x1] sm:$0xff]
        %v481 = vld [vmem:[%s403 + $0x9] sm:$0xff]
        %v482 = vld [vmem:[%s403 + $0x19] sm:$0xff]
        %v483 = vld [vmem:[%s403 + $0x21] sm:$0xff]
        %v484 = vld [vmem:[%s403 + $0x31] sm:$0xff]
        %v485 = vld [vmem:[%s403 + $0x39] sm:$0xff]
        %v486 = vld [vmem:[%s403 + $0x49] sm:$0xff]
        %v487 = vld [vmem:[%s403 + $0x51] sm:$0xff]
        %v488 = vld [vmem:[%s403 + $0x61] sm:$0xff]
        %v489 = vld [vmem:[%s403 + $0x69] sm:$0xff]
        %v490 = vld [vmem:[%s403 + $0x79] sm:$0xff]
        %v491 = vld [vmem:[%s403 + $0x81] sm:$0xff]
        %v492 = vld [vmem:[%s403 + $0x91] sm:$0xff]
        %v493 = vld [vmem:[%s403 + $0x99] sm:$0xff]
        %v494 = vld [vmem:[%s403 + $0xa9] sm:$0xff]
        %v495 = vld [vmem:[%s403 + $0xb1] sm:$0xff]
        %v496 = vld [vmem:[%s403 + $0xc1] sm:$0xff]
        %v497 = vld [vmem:[%s403 + $0xc9] sm:$0xff]
        %v498 = vld [vmem:[%s403 + $0xd9] sm:$0xff]
        %v499 = vld [vmem:[%s403 + $0xe1] sm:$0xff]
        %v500 = vld [vmem:[%s403 + $0xf1] sm:$0xff]
        %v501 = vld [vmem:[%s403 + $0xf9] sm:$0xff]
        %v502 = vld [vmem:[%s403 + $0x109] sm:$0xff]
        %v503 = vld [vmem:[%s403 + $0x111] sm:$0xff]
        %v504 = vld [vmem:[%s403 + $0x121] sm:$0xff]
        %v505 = vld [vmem:[%s403 + $0x129] sm:$0xff]
        %v506 = vld [vmem:[%s403 + $0x139] sm:$0xff]
        %v507 = vld [vmem:[%s403 + $0x141] sm:$0xff]
        %v508 = vld [vmem:[%s403 + $0x151] sm:$0xff]
        %v509 = vld [vmem:[%s403 + $0x159] sm:$0xff]
        %v510 = vld [vmem:[%s403 + $0x169] sm:$0xff]
        %v511 = vld [vmem:[%s403 + $0x171] sm:$0xff]
        %v512 = vld [vmem:[%s420 + $0x1] sm:$0xff]
        %v513 = vld [vmem:[%s420 + $0x9] sm:$0xff]
        %v514 = vld [vmem:[%s434 + $0x1] sm:$0xff]
        %v515 = vld [vmem:[%s434 + $0x9] sm:$0xff]
        %v516 = vld [vmem:[%s403 + $0x2] sm:$0xff]
        %v517 = vld [vmem:[%s403 + $0xa] sm:$0xff]
        %v518 = vld [vmem:[%s403 + $0x1a] sm:$0xff]
        %v519 = vld [vmem:[%s403 + $0x22] sm:$0xff]
        %v520 = vld [vmem:[%s403 + $0x32] sm:$0xff]
        %v521 = vld [vmem:[%s403 + $0x3a] sm:$0xff]
        %v522 = vld [vmem:[%s403 + $0x4a] sm:$0xff]
        %v523 = vld [vmem:[%s403 + $0x52] sm:$0xff]
        %v524 = vld [vmem:[%s403 + $0x62] sm:$0xff]
        %v525 = vld [vmem:[%s403 + $0x6a] sm:$0xff]
        %v526 = vld [vmem:[%s403 + $0x7a] sm:$0xff]
        %v527 = vld [vmem:[%s403 + $0x82] sm:$0xff]
        %v528 = vld [vmem:[%s403 + $0x92] sm:$0xff]
        %v529 = vld [vmem:[%s403 + $0x9a] sm:$0xff]
        %v530 = vld [vmem:[%s403 + $0xaa] sm:$0xff]
        %v531 = vld [vmem:[%s403 + $0xb2] sm:$0xff]
        %v532 = vld [vmem:[%s403 + $0xc2] sm:$0xff]
        %v533 = vld [vmem:[%s403 + $0xca] sm:$0xff]
        %v534 = vld [vmem:[%s403 + $0xda] sm:$0xff]
        %v535 = vld [vmem:[%s403 + $0xe2] sm:$0xff]
        %v536 = vld [vmem:[%s403 + $0xf2] sm:$0xff]
        %v537 = vld [vmem:[%s403 + $0xfa] sm:$0xff]
        %v538 = vld [vmem:[%s403 + $0x10a] sm:$0xff]
        %v539 = vld [vmem:[%s403 + $0x112] sm:$0xff]
        %v540 = vld [vmem:[%s403 + $0x122] sm:$0xff]
        %v541 = vld [vmem:[%s403 + $0x12a] sm:$0xff]
        %v542 = vld [vmem:[%s403 + $0x13a] sm:$0xff]
        %v543 = vld [vmem:[%s403 + $0x142] sm:$0xff]
        %v544 = vld [vmem:[%s403 + $0x152] sm:$0xff]
        %v545 = vld [vmem:[%s403 + $0x15a] sm:$0xff]
        %v546 = vld [vmem:[%s403 + $0x16a] sm:$0xff]
        %v547 = vld [vmem:[%s403 + $0x172] sm:$0xff]
        %v548 = vld [vmem:[%s420 + $0x2] sm:$0xff]
        %v549 = vld [vmem:[%s420 + $0xa] sm:$0xff]
        %v550 = vld [vmem:[%s434 + $0x2] sm:$0xff]
        %v551 = vld [vmem:[%s434 + $0xa] sm:$0xff]
        %v552 = vperm.slane %v439, 0
        %v553 = vmul.f32 %v444, %v552
        %v554 = vmul.f32 %v445, %v552
        %v555 = vmul.f32 %v446, %v552
        %v556 = vmul.f32 %v447, %v552
        %v557 = vmul.f32 %v448, %v552
        %v558 = vmul.f32 %v449, %v552
        %v559 = vmul.f32 %v450, %v552
        %v560 = vmul.f32 %v451, %v552
        %v561 = vmul.f32 %v452, %v552
        %v562 = vmul.f32 %v453, %v552
        %v563 = vmul.f32 %v454, %v552
        %v564 = vmul.f32 %v455, %v552
        %v565 = vmul.f32 %v456, %v552
        %v566 = vmul.f32 %v457, %v552
        %v567 = vmul.f32 %v458, %v552
        %v568 = vmul.f32 %v459, %v552
        %v569 = vmul.f32 %v460, %v552
        %v570 = vmul.f32 %v461, %v552
        %v571 = vmul.f32 %v462, %v552
        %v572 = vmul.f32 %v463, %v552
        %v573 = vmul.f32 %v464, %v552
        %v574 = vmul.f32 %v465, %v552
        %v575 = vmul.f32 %v466, %v552
        %v576 = vmul.f32 %v467, %v552
        %v577 = vmul.f32 %v468, %v552
        %v578 = vmul.f32 %v469, %v552
        %v579 = vmul.f32 %v470, %v552
        %v580 = vmul.f32 %v471, %v552
        %v581 = vmul.f32 %v472, %v552
        %v582 = vmul.f32 %v473, %v552
        %v583 = vmul.f32 %v474, %v552
        %v584 = vmul.f32 %v475, %v552
        %v585 = vperm.slane %v439, 1
        %v586 = vmul.f32 %v480, %v585
        %v587 = vmul.f32 %v481, %v585
        %v588 = vmul.f32 %v482, %v585
        %v589 = vmul.f32 %v483, %v585
        %v590 = vmul.f32 %v484, %v585
        %v591 = vmul.f32 %v485, %v585
        %v592 = vmul.f32 %v486, %v585
        %v593 = vmul.f32 %v487, %v585
        %v594 = vmul.f32 %v488, %v585
        %v595 = vmul.f32 %v489, %v585
        %v596 = vmul.f32 %v490, %v585
        %v597 = vmul.f32 %v491, %v585
        %v598 = vmul.f32 %v492, %v585
        %v599 = vmul.f32 %v493, %v585
        %v600 = vmul.f32 %v494, %v585
        %v601 = vmul.f32 %v495, %v585
        %v602 = vmul.f32 %v496, %v585
        %v603 = vmul.f32 %v497, %v585
        %v604 = vmul.f32 %v498, %v585
        %v605 = vmul.f32 %v499, %v585
        %v606 = vmul.f32 %v500, %v585
        %v607 = vmul.f32 %v501, %v585
        %v608 = vmul.f32 %v502, %v585
        %v609 = vmul.f32 %v503, %v585
        %v610 = vmul.f32 %v504, %v585
        %v611 = vmul.f32 %v505, %v585
        %v612 = vmul.f32 %v506, %v585
        %v613 = vmul.f32 %v507, %v585
        %v614 = vmul.f32 %v508, %v585
        %v615 = vmul.f32 %v509, %v585
        %v616 = vmul.f32 %v510, %v585
        %v617 = vmul.f32 %v511, %v585
        %v618 = vadd.f32 %v553, %v586
        %v619 = vadd.f32 %v554, %v587
        %v620 = vadd.f32 %v555, %v588
        %v621 = vadd.f32 %v556, %v589
        %v622 = vadd.f32 %v557, %v590
        %v623 = vadd.f32 %v558, %v591
        %v624 = vadd.f32 %v559, %v592
        %v625 = vadd.f32 %v560, %v593
        %v626 = vadd.f32 %v561, %v594
        %v627 = vadd.f32 %v562, %v595
        %v628 = vadd.f32 %v563, %v596
        %v629 = vadd.f32 %v564, %v597
        %v630 = vadd.f32 %v565, %v598
        %v631 = vadd.f32 %v566, %v599
        %v632 = vadd.f32 %v567, %v600
        %v633 = vadd.f32 %v568, %v601
        %v634 = vadd.f32 %v569, %v602
        %v635 = vadd.f32 %v570, %v603
        %v636 = vadd.f32 %v571, %v604
        %v637 = vadd.f32 %v572, %v605
        %v638 = vadd.f32 %v573, %v606
        %v639 = vadd.f32 %v574, %v607
        %v640 = vadd.f32 %v575, %v608
        %v641 = vadd.f32 %v576, %v609
        %v642 = vadd.f32 %v577, %v610
        %v643 = vadd.f32 %v578, %v611
        %v644 = vadd.f32 %v579, %v612
        %v645 = vadd.f32 %v580, %v613
        %v646 = vadd.f32 %v581, %v614
        %v647 = vadd.f32 %v582, %v615
        %v648 = vadd.f32 %v583, %v616
        %v649 = vadd.f32 %v584, %v617
        %v650 = vperm.slane %v439, 2
        %v651 = vmul.f32 %v516, %v650
        %v652 = vmul.f32 %v517, %v650
        %v653 = vmul.f32 %v518, %v650
        %v654 = vmul.f32 %v519, %v650
        %v655 = vmul.f32 %v520, %v650
        %v656 = vmul.f32 %v521, %v650
        %v657 = vmul.f32 %v522, %v650
        %v658 = vmul.f32 %v523, %v650
        %v659 = vmul.f32 %v524, %v650
        %v660 = vmul.f32 %v525, %v650
        %v661 = vmul.f32 %v526, %v650
        %v662 = vmul.f32 %v527, %v650
        %v663 = vmul.f32 %v528, %v650
        %v664 = vmul.f32 %v529, %v650
        %v665 = vmul.f32 %v530, %v650
        %v666 = vmul.f32 %v531, %v650
        %v667 = vmul.f32 %v532, %v650
        %v668 = vmul.f32 %v533, %v650
        %v669 = vmul.f32 %v534, %v650
        %v670 = vmul.f32 %v535, %v650
        %v671 = vmul.f32 %v536, %v650
        %v672 = vmul.f32 %v537, %v650
        %v673 = vmul.f32 %v538, %v650
        %v674 = vmul.f32 %v539, %v650
        %v675 = vmul.f32 %v540, %v650
        %v676 = vmul.f32 %v541, %v650
        %v677 = vmul.f32 %v542, %v650
        %v678 = vmul.f32 %v543, %v650
        %v679 = vmul.f32 %v544, %v650
        %v680 = vmul.f32 %v545, %v650
        %v681 = vmul.f32 %v546, %v650
        %v682 = vmul.f32 %v547, %v650
        %v683 = vadd.f32 %v618, %v651
        %v684 = vadd.f32 %v619, %v652
        %v685 = vadd.f32 %v620, %v653
        %v686 = vadd.f32 %v621, %v654
        %v687 = vadd.f32 %v622, %v655
        %v688 = vadd.f32 %v623, %v656
        %v689 = vadd.f32 %v624, %v657
        %v690 = vadd.f32 %v625, %v658
        %v691 = vadd.f32 %v626, %v659
        %v692 = vadd.f32 %v627, %v660
        %v693 = vadd.f32 %v628, %v661
        %v694 = vadd.f32 %v629, %v662
        %v695 = vadd.f32 %v630, %v663
        %v696 = vadd.f32 %v631, %v664
        %v697 = vadd.f32 %v632, %v665
        %v698 = vadd.f32 %v633, %v666
        %v699 = vadd.f32 %v634, %v667
        %v700 = vadd.f32 %v635, %v668
        %v701 = vadd.f32 %v636, %v669
        %v702 = vadd.f32 %v637, %v670
        %v703 = vadd.f32 %v638, %v671
        %v704 = vadd.f32 %v639, %v672
        %v705 = vadd.f32 %v640, %v673
        %v706 = vadd.f32 %v641, %v674
        %v707 = vadd.f32 %v642, %v675
        %v708 = vadd.f32 %v643, %v676
        %v709 = vadd.f32 %v644, %v677
        %v710 = vadd.f32 %v645, %v678
        %v711 = vadd.f32 %v646, %v679
        %v712 = vadd.f32 %v647, %v680
        %v713 = vadd.f32 %v648, %v681
        %v714 = vadd.f32 %v649, %v682
        %v715 = vperm.slane %v440, 0
        %v716 = vmul.f32 %v446, %v715
        %v717 = vmul.f32 %v447, %v715
        %v718 = vmul.f32 %v448, %v715
        %v719 = vmul.f32 %v449, %v715
        %v720 = vmul.f32 %v450, %v715
        %v721 = vmul.f32 %v451, %v715
        %v722 = vmul.f32 %v452, %v715
        %v723 = vmul.f32 %v453, %v715
        %v724 = vmul.f32 %v454, %v715
        %v725 = vmul.f32 %v455, %v715
        %v726 = vmul.f32 %v456, %v715
        %v727 = vmul.f32 %v457, %v715
        %v728 = vmul.f32 %v458, %v715
        %v729 = vmul.f32 %v459, %v715
        %v730 = vmul.f32 %v460, %v715
        %v731 = vmul.f32 %v461, %v715
        %v732 = vmul.f32 %v462, %v715
        %v733 = vmul.f32 %v463, %v715
        %v734 = vmul.f32 %v464, %v715
        %v735 = vmul.f32 %v465, %v715
        %v736 = vmul.f32 %v466, %v715
        %v737 = vmul.f32 %v467, %v715
        %v738 = vmul.f32 %v468, %v715
        %v739 = vmul.f32 %v469, %v715
        %v740 = vmul.f32 %v470, %v715
        %v741 = vmul.f32 %v471, %v715
        %v742 = vmul.f32 %v472, %v715
        %v743 = vmul.f32 %v473, %v715
        %v744 = vmul.f32 %v474, %v715
        %v745 = vmul.f32 %v475, %v715
        %v746 = vmul.f32 %v476, %v715
        %v747 = vmul.f32 %v477, %v715
        %v748 = vadd.f32 %v683, %v716
        %v749 = vadd.f32 %v684, %v717
        %v750 = vadd.f32 %v685, %v718
        %v751 = vadd.f32 %v686, %v719
        %v752 = vadd.f32 %v687, %v720
        %v753 = vadd.f32 %v688, %v721
        %v754 = vadd.f32 %v689, %v722
        %v755 = vadd.f32 %v690, %v723
        %v756 = vadd.f32 %v691, %v724
        %v757 = vadd.f32 %v692, %v725
        %v758 = vadd.f32 %v693, %v726
        %v759 = vadd.f32 %v694, %v727
        %v760 = vadd.f32 %v695, %v728
        %v761 = vadd.f32 %v696, %v729
        %v762 = vadd.f32 %v697, %v730
        %v763 = vadd.f32 %v698, %v731
        %v764 = vadd.f32 %v699, %v732
        %v765 = vadd.f32 %v700, %v733
        %v766 = vadd.f32 %v701, %v734
        %v767 = vadd.f32 %v702, %v735
        %v768 = vadd.f32 %v703, %v736
        %v769 = vadd.f32 %v704, %v737
        %v770 = vadd.f32 %v705, %v738
        %v771 = vadd.f32 %v706, %v739
        %v772 = vadd.f32 %v707, %v740
        %v773 = vadd.f32 %v708, %v741
        %v774 = vadd.f32 %v709, %v742
        %v775 = vadd.f32 %v710, %v743
        %v776 = vadd.f32 %v711, %v744
        %v777 = vadd.f32 %v712, %v745
        %v778 = vadd.f32 %v713, %v746
        %v779 = vadd.f32 %v714, %v747
        %v780 = vperm.slane %v440, 1
        %v781 = vmul.f32 %v482, %v780
        %v782 = vmul.f32 %v483, %v780
        %v783 = vmul.f32 %v484, %v780
        %v784 = vmul.f32 %v485, %v780
        %v785 = vmul.f32 %v486, %v780
        %v786 = vmul.f32 %v487, %v780
        %v787 = vmul.f32 %v488, %v780
        %v788 = vmul.f32 %v489, %v780
        %v789 = vmul.f32 %v490, %v780
        %v790 = vmul.f32 %v491, %v780
        %v791 = vmul.f32 %v492, %v780
        %v792 = vmul.f32 %v493, %v780
        %v793 = vmul.f32 %v494, %v780
        %v794 = vmul.f32 %v495, %v780
        %v795 = vmul.f32 %v496, %v780
        %v796 = vmul.f32 %v497, %v780
        %v797 = vmul.f32 %v498, %v780
        %v798 = vmul.f32 %v499, %v780
        %v799 = vmul.f32 %v500, %v780
        %v800 = vmul.f32 %v501, %v780
        %v801 = vmul.f32 %v502, %v780
        %v802 = vmul.f32 %v503, %v780
        %v803 = vmul.f32 %v504, %v780
        %v804 = vmul.f32 %v505, %v780
        %v805 = vmul.f32 %v506, %v780
        %v806 = vmul.f32 %v507, %v780
        %v807 = vmul.f32 %v508, %v780
        %v808 = vmul.f32 %v509, %v780
        %v809 = vmul.f32 %v510, %v780
        %v810 = vmul.f32 %v511, %v780
        %v811 = vmul.f32 %v512, %v780
        %v812 = vmul.f32 %v513, %v780
        %v813 = vadd.f32 %v748, %v781
        %v814 = vadd.f32 %v749, %v782
        %v815 = vadd.f32 %v750, %v783
        %v816 = vadd.f32 %v751, %v784
        %v817 = vadd.f32 %v752, %v785
        %v818 = vadd.f32 %v753, %v786
        %v819 = vadd.f32 %v754, %v787
        %v820 = vadd.f32 %v755, %v788
        %v821 = vadd.f32 %v756, %v789
        %v822 = vadd.f32 %v757, %v790
        %v823 = vadd.f32 %v758, %v791
        %v824 = vadd.f32 %v759, %v792
        %v825 = vadd.f32 %v760, %v793
        %v826 = vadd.f32 %v761, %v794
        %v827 = vadd.f32 %v762, %v795
        %v828 = vadd.f32 %v763, %v796
        %v829 = vadd.f32 %v764, %v797
        %v830 = vadd.f32 %v765, %v798
        %v831 = vadd.f32 %v766, %v799
        %v832 = vadd.f32 %v767, %v800
        %v833 = vadd.f32 %v768, %v801
        %v834 = vadd.f32 %v769, %v802
        %v835 = vadd.f32 %v770, %v803
        %v836 = vadd.f32 %v771, %v804
        %v837 = vadd.f32 %v772, %v805
        %v838 = vadd.f32 %v773, %v806
        %v839 = vadd.f32 %v774, %v807
        %v840 = vadd.f32 %v775, %v808
        %v841 = vadd.f32 %v776, %v809
        %v842 = vadd.f32 %v777, %v810
        %v843 = vadd.f32 %v778, %v811
        %v844 = vadd.f32 %v779, %v812
        %v845 = vperm.slane %v440, 2
        %v846 = vmul.f32 %v518, %v845
        %v847 = vmul.f32 %v519, %v845
        %v848 = vmul.f32 %v520, %v845
        %v849 = vmul.f32 %v521, %v845
        %v850 = vmul.f32 %v522, %v845
        %v851 = vmul.f32 %v523, %v845
        %v852 = vmul.f32 %v524, %v845
        %v853 = vmul.f32 %v525, %v845
        %v854 = vmul.f32 %v526, %v845
        %v855 = vmul.f32 %v527, %v845
        %v856 = vmul.f32 %v528, %v845
        %v857 = vmul.f32 %v529, %v845
        %v858 = vmul.f32 %v530, %v845
        %v859 = vmul.f32 %v531, %v845
        %v860 = vmul.f32 %v532, %v845
        %v861 = vmul.f32 %v533, %v845
        %v862 = vmul.f32 %v534, %v845
        %v863 = vmul.f32 %v535, %v845
        %v864 = vmul.f32 %v536, %v845
        %v865 = vmul.f32 %v537, %v845
        %v866 = vmul.f32 %v538, %v845
        %v867 = vmul.f32 %v539, %v845
        %v868 = vmul.f32 %v540, %v845
        %v869 = vmul.f32 %v541, %v845
        %v870 = vmul.f32 %v542, %v845
        %v871 = vmul.f32 %v543, %v845
        %v872 = vmul.f32 %v544, %v845
        %v873 = vmul.f32 %v545, %v845
        %v874 = vmul.f32 %v546, %v845
        %v875 = vmul.f32 %v547, %v845
        %v876 = vmul.f32 %v548, %v845
        %v877 = vmul.f32 %v549, %v845
        %v878 = vadd.f32 %v813, %v846
        %v879 = vadd.f32 %v814, %v847
        %v880 = vadd.f32 %v815, %v848
        %v881 = vadd.f32 %v816, %v849
        %v882 = vadd.f32 %v817, %v850
        %v883 = vadd.f32 %v818, %v851
        %v884 = vadd.f32 %v819, %v852
        %v885 = vadd.f32 %v820, %v853
        %v886 = vadd.f32 %v821, %v854
        %v887 = vadd.f32 %v822, %v855
        %v888 = vadd.f32 %v823, %v856
        %v889 = vadd.f32 %v824, %v857
        %v890 = vadd.f32 %v825, %v858
        %v891 = vadd.f32 %v826, %v859
        %v892 = vadd.f32 %v827, %v860
        %v893 = vadd.f32 %v828, %v861
        %v894 = vadd.f32 %v829, %v862
        %v895 = vadd.f32 %v830, %v863
        %v896 = vadd.f32 %v831, %v864
        %v897 = vadd.f32 %v832, %v865
        %v898 = vadd.f32 %v833, %v866
        %v899 = vadd.f32 %v834, %v867
        %v900 = vadd.f32 %v835, %v868
        %v901 = vadd.f32 %v836, %v869
        %v902 = vadd.f32 %v837, %v870
        %v903 = vadd.f32 %v838, %v871
        %v904 = vadd.f32 %v839, %v872
        %v905 = vadd.f32 %v840, %v873
        %v906 = vadd.f32 %v841, %v874
        %v907 = vadd.f32 %v842, %v875
        %v908 = vadd.f32 %v843, %v876
        %v909 = vadd.f32 %v844, %v877
        %v910 = vperm.slane %v441, 0
        %v911 = vmul.f32 %v448, %v910
        %v912 = vmul.f32 %v449, %v910
        %v913 = vmul.f32 %v450, %v910
        %v914 = vmul.f32 %v451, %v910
        %v915 = vmul.f32 %v452, %v910
        %v916 = vmul.f32 %v453, %v910
        %v917 = vmul.f32 %v454, %v910
        %v918 = vmul.f32 %v455, %v910
        %v919 = vmul.f32 %v456, %v910
        %v920 = vmul.f32 %v457, %v910
        %v921 = vmul.f32 %v458, %v910
        %v922 = vmul.f32 %v459, %v910
        %v923 = vmul.f32 %v460, %v910
        %v924 = vmul.f32 %v461, %v910
        %v925 = vmul.f32 %v462, %v910
        %v926 = vmul.f32 %v463, %v910
        %v927 = vmul.f32 %v464, %v910
        %v928 = vmul.f32 %v465, %v910
        %v929 = vmul.f32 %v466, %v910
        %v930 = vmul.f32 %v467, %v910
        %v931 = vmul.f32 %v468, %v910
        %v932 = vmul.f32 %v469, %v910
        %v933 = vmul.f32 %v470, %v910
        %v934 = vmul.f32 %v471, %v910
        %v935 = vmul.f32 %v472, %v910
        %v936 = vmul.f32 %v473, %v910
        %v937 = vmul.f32 %v474, %v910
        %v938 = vmul.f32 %v475, %v910
        %v939 = vmul.f32 %v476, %v910
        %v940 = vmul.f32 %v477, %v910
        %v941 = vmul.f32 %v478, %v910
        %v942 = vmul.f32 %v479, %v910
        %v943 = vadd.f32 %v878, %v911
        %v944 = vadd.f32 %v879, %v912
        %v945 = vadd.f32 %v880, %v913
        %v946 = vadd.f32 %v881, %v914
        %v947 = vadd.f32 %v882, %v915
        %v948 = vadd.f32 %v883, %v916
        %v949 = vadd.f32 %v884, %v917
        %v950 = vadd.f32 %v885, %v918
        %v951 = vadd.f32 %v886, %v919
        %v952 = vadd.f32 %v887, %v920
        %v953 = vadd.f32 %v888, %v921
        %v954 = vadd.f32 %v889, %v922
        %v955 = vadd.f32 %v890, %v923
        %v956 = vadd.f32 %v891, %v924
        %v957 = vadd.f32 %v892, %v925
        %v958 = vadd.f32 %v893, %v926
        %v959 = vadd.f32 %v894, %v927
        %v960 = vadd.f32 %v895, %v928
        %v961 = vadd.f32 %v896, %v929
        %v962 = vadd.f32 %v897, %v930
        %v963 = vadd.f32 %v898, %v931
        %v964 = vadd.f32 %v899, %v932
        %v965 = vadd.f32 %v900, %v933
        %v966 = vadd.f32 %v901, %v934
        %v967 = vadd.f32 %v902, %v935
        %v968 = vadd.f32 %v903, %v936
        %v969 = vadd.f32 %v904, %v937
        %v970 = vadd.f32 %v905, %v938
        %v971 = vadd.f32 %v906, %v939
        %v972 = vadd.f32 %v907, %v940
        %v973 = vadd.f32 %v908, %v941
        %v974 = vadd.f32 %v909, %v942
        %v975 = vperm.slane %v441, 1
        %v976 = vmul.f32 %v484, %v975
        %v977 = vmul.f32 %v485, %v975
        %v978 = vmul.f32 %v486, %v975
        %v979 = vmul.f32 %v487, %v975
        %v980 = vmul.f32 %v488, %v975
        %v981 = vmul.f32 %v489, %v975
        %v982 = vmul.f32 %v490, %v975
        %v983 = vmul.f32 %v491, %v975
        %v984 = vmul.f32 %v492, %v975
        %v985 = vmul.f32 %v493, %v975
        %v986 = vmul.f32 %v494, %v975
        %v987 = vmul.f32 %v495, %v975
        %v988 = vmul.f32 %v496, %v975
        %v989 = vmul.f32 %v497, %v975
        %v990 = vmul.f32 %v498, %v975
        %v991 = vmul.f32 %v499, %v975
        %v992 = vmul.f32 %v500, %v975
        %v993 = vmul.f32 %v501, %v975
        %v994 = vmul.f32 %v502, %v975
        %v995 = vmul.f32 %v503, %v975
        %v996 = vmul.f32 %v504, %v975
        %v997 = vmul.f32 %v505, %v975
        %v998 = vmul.f32 %v506, %v975
        %v999 = vmul.f32 %v507, %v975
        %v1000 = vmul.f32 %v508, %v975
        %v1001 = vmul.f32 %v509, %v975
        %v1002 = vmul.f32 %v510, %v975
        %v1003 = vmul.f32 %v511, %v975
        %v1004 = vmul.f32 %v512, %v975
        %v1005 = vmul.f32 %v513, %v975
        %v1006 = vmul.f32 %v514, %v975
        %v1007 = vmul.f32 %v515, %v975
        %v1008 = vadd.f32 %v943, %v976
        %v1009 = vadd.f32 %v944, %v977
        %v1010 = vadd.f32 %v945, %v978
        %v1011 = vadd.f32 %v946, %v979
        %v1012 = vadd.f32 %v947, %v980
        %v1013 = vadd.f32 %v948, %v981
        %v1014 = vadd.f32 %v949, %v982
        %v1015 = vadd.f32 %v950, %v983
        %v1016 = vadd.f32 %v951, %v984
        %v1017 = vadd.f32 %v952, %v985
        %v1018 = vadd.f32 %v953, %v986
        %v1019 = vadd.f32 %v954, %v987
        %v1020 = vadd.f32 %v955, %v988
        %v1021 = vadd.f32 %v956, %v989
        %v1022 = vadd.f32 %v957, %v990
        %v1023 = vadd.f32 %v958, %v991
        %v1024 = vadd.f32 %v959, %v992
        %v1025 = vadd.f32 %v960, %v993
        %v1026 = vadd.f32 %v961, %v994
        %v1027 = vadd.f32 %v962, %v995
        %v1028 = vadd.f32 %v963, %v996
        %v1029 = vadd.f32 %v964, %v997
        %v1030 = vadd.f32 %v965, %v998
        %v1031 = vadd.f32 %v966, %v999
        %v1032 = vadd.f32 %v967, %v1000
        %v1033 = vadd.f32 %v968, %v1001
        %v1034 = vadd.f32 %v969, %v1002
        %v1035 = vadd.f32 %v970, %v1003
        %v1036 = vadd.f32 %v971, %v1004
        %v1037 = vadd.f32 %v972, %v1005
        %v1038 = vadd.f32 %v973, %v1006
        %v1039 = vadd.f32 %v974, %v1007
        %v1040 = vperm.slane %v441, 2
        %v1041 = vmul.f32 %v520, %v1040
        %v1042 = vmul.f32 %v521, %v1040
        %v1043 = vmul.f32 %v522, %v1040
        %v1044 = vmul.f32 %v523, %v1040
        %v1045 = vmul.f32 %v524, %v1040
        %v1046 = vmul.f32 %v525, %v1040
        %v1047 = vmul.f32 %v526, %v1040
        %v1048 = vmul.f32 %v527, %v1040
        %v1049 = vmul.f32 %v528, %v1040
        %v1050 = vmul.f32 %v529, %v1040
        %v1051 = vmul.f32 %v530, %v1040
        %v1052 = vmul.f32 %v531, %v1040
        %v1053 = vmul.f32 %v532, %v1040
        %v1054 = vmul.f32 %v533, %v1040
        %v1055 = vmul.f32 %v534, %v1040
        %v1056 = vmul.f32 %v535, %v1040
        %v1057 = vmul.f32 %v536, %v1040
        %v1058 = vmul.f32 %v537, %v1040
        %v1059 = vmul.f32 %v538, %v1040
        %v1060 = vmul.f32 %v539, %v1040
        %v1061 = vmul.f32 %v540, %v1040
        %v1062 = vmul.f32 %v541, %v1040
        %v1063 = vmul.f32 %v542, %v1040
        %v1064 = vmul.f32 %v543, %v1040
        %v1065 = vmul.f32 %v544, %v1040
        %v1066 = vmul.f32 %v545, %v1040
        %v1067 = vmul.f32 %v546, %v1040
        %v1068 = vmul.f32 %v547, %v1040
        %v1069 = vmul.f32 %v548, %v1040
        %v1070 = vmul.f32 %v549, %v1040
        %v1071 = vmul.f32 %v550, %v1040
        %v1072 = vmul.f32 %v551, %v1040
        %v1073 = vadd.f32 %v1008, %v1041
        %v1074 = vadd.f32 %v1009, %v1042
        %v1075 = vadd.f32 %v1010, %v1043
        %v1076 = vadd.f32 %v1011, %v1044
        %v1077 = vadd.f32 %v1012, %v1045
        %v1078 = vadd.f32 %v1013, %v1046
        %v1079 = vadd.f32 %v1014, %v1047
        %v1080 = vadd.f32 %v1015, %v1048
        %v1081 = vadd.f32 %v1016, %v1049
        %v1082 = vadd.f32 %v1017, %v1050
        %v1083 = vadd.f32 %v1018, %v1051
        %v1084 = vadd.f32 %v1019, %v1052
        %v1085 = vadd.f32 %v1020, %v1053
        %v1086 = vadd.f32 %v1021, %v1054
        %v1087 = vadd.f32 %v1022, %v1055
        %v1088 = vadd.f32 %v1023, %v1056
        %v1089 = vadd.f32 %v1024, %v1057
        %v1090 = vadd.f32 %v1025, %v1058
        %v1091 = vadd.f32 %v1026, %v1059
        %v1092 = vadd.f32 %v1027, %v1060
        %v1093 = vadd.f32 %v1028, %v1061
        %v1094 = vadd.f32 %v1029, %v1062
        %v1095 = vadd.f32 %v1030, %v1063
        %v1096 = vadd.f32 %v1031, %v1064
        %v1097 = vadd.f32 %v1032, %v1065
        %v1098 = vadd.f32 %v1033, %v1066
        %v1099 = vadd.f32 %v1034, %v1067
        %v1100 = vadd.f32 %v1035, %v1068
        %v1101 = vadd.f32 %v1036, %v1069
        %v1102 = vadd.f32 %v1037, %v1070
        %v1103 = vadd.f32 %v1038, %v1071
        %v1104 = vadd.f32 %v1039, %v1072
        %v1106 = vperm.slane %v442, 0
        %v1108 = vadd.f32 %v1073, %v1106
        %v1109 = vadd.f32 %v1074, %v1106
        %v1110 = vadd.f32 %v1075, %v1106
        %v1111 = vadd.f32 %v1076, %v1106
        %v1112 = vadd.f32 %v1077, %v1106
        %v1113 = vadd.f32 %v1078, %v1106
        %v1114 = vadd.f32 %v1079, %v1106
        %v1115 = vadd.f32 %v1080, %v1106
        %v1116 = vadd.f32 %v1081, %v1106
        %v1117 = vadd.f32 %v1082, %v1106
        %v1118 = vadd.f32 %v1083, %v1106
        %v1119 = vadd.f32 %v1084, %v1106
        %v1120 = vadd.f32 %v1085, %v1106
        %v1121 = vadd.f32 %v1086, %v1106
        %v1122 = vadd.f32 %v1087, %v1106
        %v1123 = vadd.f32 %v1088, %v1106
        %v1124 = vadd.f32 %v1089, %v1106
        %v1125 = vadd.f32 %v1090, %v1106
        %v1126 = vadd.f32 %v1091, %v1106
        %v1127 = vadd.f32 %v1092, %v1106
        %v1128 = vadd.f32 %v1093, %v1106
        %v1129 = vadd.f32 %v1094, %v1106
        %v1130 = vadd.f32 %v1095, %v1106
        %v1131 = vadd.f32 %v1096, %v1106
        %v1132 = vadd.f32 %v1097, %v1106
        %v1133 = vadd.f32 %v1098, %v1106
        %v1134 = vadd.f32 %v1099, %v1106
        %v1135 = vadd.f32 %v1100, %v1106
        %v1136 = vadd.f32 %v1101, %v1106
        %v1137 = vadd.f32 %v1102, %v1106
        %v1138 = vadd.f32 %v1103, %v1106
        %v1139 = vadd.f32 %v1104, %v1106
        %v1140 = vmax.f32 %v1108, 0.0
        %v1141 = vmax.f32 %v1109, 0.0
        %v1142 = vmax.f32 %v1110, 0.0
        %v1143 = vmax.f32 %v1111, 0.0
        %v1144 = vmax.f32 %v1112, 0.0
        %v1145 = vmax.f32 %v1113, 0.0
        %v1146 = vmax.f32 %v1114, 0.0
        %v1147 = vmax.f32 %v1115, 0.0
        %v1148 = vmax.f32 %v1116, 0.0
        %v1149 = vmax.f32 %v1117, 0.0
        %v1150 = vmax.f32 %v1118, 0.0
        %v1151 = vmax.f32 %v1119, 0.0
        %v1152 = vmax.f32 %v1120, 0.0
        %v1153 = vmax.f32 %v1121, 0.0
        %v1154 = vmax.f32 %v1122, 0.0
        %v1155 = vmax.f32 %v1123, 0.0
        %v1156 = vmax.f32 %v1124, 0.0
        %v1157 = vmax.f32 %v1125, 0.0
        %v1158 = vmax.f32 %v1126, 0.0
        %v1159 = vmax.f32 %v1127, 0.0
        %v1160 = vmax.f32 %v1128, 0.0
        %v1161 = vmax.f32 %v1129, 0.0
        %v1162 = vmax.f32 %v1130, 0.0
        %v1163 = vmax.f32 %v1131, 0.0
        %v1164 = vmax.f32 %v1132, 0.0
        %v1165 = vmax.f32 %v1133, 0.0
        %v1166 = vmax.f32 %v1134, 0.0
        %v1167 = vmax.f32 %v1135, 0.0
        %v1168 = vmax.f32 %v1136, 0.0
        %v1169 = vmax.f32 %v1137, 0.0
        %v1170 = vmax.f32 %v1138, 0.0
        %v1171 = vmax.f32 %v1139, 0.0
        %v1172 = vld [vmem:[%s5] sm:$0xff]
        %v1173 = vld [vmem:[%s5 + $0x8] sm:$0xff]
        %v1174 = vld [vmem:[%s5 + $0x10] sm:$0xff]
        %v1175 = vld [vmem:[%s5 + $0x18] sm:$0xff]
        %v1176 = vld [vmem:[%s5 + $0x20] sm:$0xff]
        %v1177 = vld [vmem:[%s5 + $0x28] sm:$0xff]
        %v1178 = vld [vmem:[%s5 + $0x30] sm:$0xff]
        %v1179 = vld [vmem:[%s5 + $0x38] sm:$0xff]
        %v1180 = vld [vmem:[%s5 + $0x40] sm:$0xff]
        %v1181 = vld [vmem:[%s5 + $0x48] sm:$0xff]
        %v1182 = vld [vmem:[%s5 + $0x50] sm:$0xff]
        %v1183 = vld [vmem:[%s5 + $0x58] sm:$0xff]
        %v1184 = vld [vmem:[%s5 + $0x60] sm:$0xff]
        %v1185 = vld [vmem:[%s5 + $0x68] sm:$0xff]
        %v1186 = vld [vmem:[%s5 + $0x70] sm:$0xff]
        %v1187 = vld [vmem:[%s5 + $0x78] sm:$0xff]
        %v1189 = vperm.slane %v443, 0
        %1191 = vmatpush.msra.mxu0 %v1187
        %1192 = vmatpush.msra.mxu0 %v1186
        %1193 = vmatpush.msra.mxu0 %v1185
        %1194 = vmatpush.msra.mxu0 %v1184
        %1195 = vmatpush.msra.mxu0 %v1183
        %1196 = vmatpush.msra.mxu0 %v1182
        %1197 = vmatpush.msra.mxu0 %v1181
        %1198 = vmatpush.msra.mxu0 %v1180
        %1199 = vmatpush.msra.mxu0 %v1179
        %1200 = vmatpush.msra.mxu0 %v1178
        %1201 = vmatpush.msra.mxu0 %v1177
        %1202 = vmatpush.msra.mxu0 %v1176
        %1203 = vmatpush.msra.mxu0 %v1175
        %1204 = vmatpush.msra.mxu0 %v1174
        %1205 = vmatpush.msra.mxu0 %v1173
        %1206 = vmatpush.msra.mxu0 %v1172
        %1207 = vmatmul.f32.gmra.mxu0 %v1140
        %v1208 = vpop.f32.mrf.mxu0
        %v1209 = vadd.f32 %v1189, %v1208
        %1210 = vmatmul.f32.gmra.mxu0 %v1141
        %v1211 = vpop.f32.mrf.mxu0
        %v1212 = vadd.f32 %v1189, %v1211
        %1213 = vmatmul.f32.gmra.mxu0 %v1142
        %v1214 = vpop.f32.mrf.mxu0
        %v1215 = vadd.f32 %v1189, %v1214
        %1216 = vmatmul.f32.gmra.mxu0 %v1143
        %v1217 = vpop.f32.mrf.mxu0
        %v1218 = vadd.f32 %v1189, %v1217
        %1219 = vmatmul.f32.gmra.mxu0 %v1144
        %v1220 = vpop.f32.mrf.mxu0
        %v1221 = vadd.f32 %v1189, %v1220
        %1222 = vmatmul.f32.gmra.mxu0 %v1145
        %v1223 = vpop.f32.mrf.mxu0
        %v1224 = vadd.f32 %v1189, %v1223
        %1225 = vmatmul.f32.gmra.mxu0 %v1146
        %v1226 = vpop.f32.mrf.mxu0
        %v1227 = vadd.f32 %v1189, %v1226
        %1228 = vmatmul.f32.gmra.mxu0 %v1147
        %v1229 = vpop.f32.mrf.mxu0
        %v1230 = vadd.f32 %v1189, %v1229
        %1231 = vmatmul.f32.gmra.mxu0 %v1148
        %v1232 = vpop.f32.mrf.mxu0
        %v1233 = vadd.f32 %v1189, %v1232
        %1234 = vmatmul.f32.gmra.mxu0 %v1149
        %v1235 = vpop.f32.mrf.mxu0
        %v1236 = vadd.f32 %v1189, %v1235
        %1237 = vmatmul.f32.gmra.mxu0 %v1150
        %v1238 = vpop.f32.mrf.mxu0
        %v1239 = vadd.f32 %v1189, %v1238
        %1240 = vmatmul.f32.gmra.mxu0 %v1151
        %v1241 = vpop.f32.mrf.mxu0
        %v1242 = vadd.f32 %v1189, %v1241
        %1243 = vmatmul.f32.gmra.mxu0 %v1152
        %v1244 = vpop.f32.mrf.mxu0
        %v1245 = vadd.f32 %v1189, %v1244
        %1246 = vmatmul.f32.gmra.mxu0 %v1153
        %v1247 = vpop.f32.mrf.mxu0
        %v1248 = vadd.f32 %v1189, %v1247
        %1249 = vmatmul.f32.gmra.mxu0 %v1154
        %v1250 = vpop.f32.mrf.mxu0
        %v1251 = vadd.f32 %v1189, %v1250
        %1252 = vmatmul.f32.gmra.mxu0 %v1155
        %v1253 = vpop.f32.mrf.mxu0
        %v1254 = vadd.f32 %v1189, %v1253
        %1255 = vmatmul.f32.gmra.mxu0 %v1156
        %v1256 = vpop.f32.mrf.mxu0
        %v1257 = vadd.f32 %v1189, %v1256
        %1258 = vmatmul.f32.gmra.mxu0 %v1157
        %v1259 = vpop.f32.mrf.mxu0
        %v1260 = vadd.f32 %v1189, %v1259
        %1261 = vmatmul.f32.gmra.mxu0 %v1158
        %v1262 = vpop.f32.mrf.mxu0
        %v1263 = vadd.f32 %v1189, %v1262
        %1264 = vmatmul.f32.gmra.mxu0 %v1159
        %v1265 = vpop.f32.mrf.mxu0
        %v1266 = vadd.f32 %v1189, %v1265
        %1267 = vmatmul.f32.gmra.mxu0 %v1160
        %v1268 = vpop.f32.mrf.mxu0
        %v1269 = vadd.f32 %v1189, %v1268
        %1270 = vmatmul.f32.gmra.mxu0 %v1161
        %v1271 = vpop.f32.mrf.mxu0
        %v1272 = vadd.f32 %v1189, %v1271
        %1273 = vmatmul.f32.gmra.mxu0 %v1162
        %v1274 = vpop.f32.mrf.mxu0
        %v1275 = vadd.f32 %v1189, %v1274
        %1276 = vmatmul.f32.gmra.mxu0 %v1163
        %v1277 = vpop.f32.mrf.mxu0
        %v1278 = vadd.f32 %v1189, %v1277
        %1279 = vmatmul.f32.gmra.mxu0 %v1164
        %v1280 = vpop.f32.mrf.mxu0
        %v1281 = vadd.f32 %v1189, %v1280
        %1282 = vmatmul.f32.gmra.mxu0 %v1165
        %v1283 = vpop.f32.mrf.mxu0
        %v1284 = vadd.f32 %v1189, %v1283
        %1285 = vmatmul.f32.gmra.mxu0 %v1166
        %v1286 = vpop.f32.mrf.mxu0
        %v1287 = vadd.f32 %v1189, %v1286
        %1288 = vmatmul.f32.gmra.mxu0 %v1167
        %v1289 = vpop.f32.mrf.mxu0
        %v1290 = vadd.f32 %v1189, %v1289
        %1291 = vmatmul.f32.gmra.mxu0 %v1168
        %v1292 = vpop.f32.mrf.mxu0
        %v1293 = vadd.f32 %v1189, %v1292
        %1294 = vmatmul.f32.gmra.mxu0 %v1169
        %v1295 = vpop.f32.mrf.mxu0
        %v1296 = vadd.f32 %v1189, %v1295
        %1297 = vmatmul.f32.gmra.mxu0 %v1170
        %v1298 = vpop.f32.mrf.mxu0
        %v1299 = vadd.f32 %v1189, %v1298
        %1300 = vmatmul.f32.gmra.mxu0 %v1171
        %v1301 = vpop.f32.mrf.mxu0
        %v1302 = vadd.f32 %v1189, %v1301
        %1303 = vdwg.mxu0
        %v1304 = vmax.f32 %v1209, 0.0
        %v1305 = vmax.f32 %v1212, 0.0
        %v1306 = vmax.f32 %v1215, 0.0
        %v1307 = vmax.f32 %v1218, 0.0
        %v1308 = vmax.f32 %v1221, 0.0
        %v1309 = vmax.f32 %v1224, 0.0
        %v1310 = vmax.f32 %v1227, 0.0
        %v1311 = vmax.f32 %v1230, 0.0
        %v1312 = vmax.f32 %v1233, 0.0
        %v1313 = vmax.f32 %v1236, 0.0
        %v1314 = vmax.f32 %v1239, 0.0
        %v1315 = vmax.f32 %v1242, 0.0
        %v1316 = vmax.f32 %v1245, 0.0
        %v1317 = vmax.f32 %v1248, 0.0
        %v1318 = vmax.f32 %v1251, 0.0
        %v1319 = vmax.f32 %v1254, 0.0
        %v1320 = vmax.f32 %v1257, 0.0
        %v1321 = vmax.f32 %v1260, 0.0
        %v1322 = vmax.f32 %v1263, 0.0
        %v1323 = vmax.f32 %v1266, 0.0
        %v1324 = vmax.f32 %v1269, 0.0
        %v1325 = vmax.f32 %v1272, 0.0
        %v1326 = vmax.f32 %v1275, 0.0
        %v1327 = vmax.f32 %v1278, 0.0
        %v1328 = vmax.f32 %v1281, 0.0
        %v1329 = vmax.f32 %v1284, 0.0
        %v1330 = vmax.f32 %v1287, 0.0
        %v1331 = vmax.f32 %v1290, 0.0
        %v1332 = vmax.f32 %v1293, 0.0
        %v1333 = vmax.f32 %v1296, 0.0
        %v1334 = vmax.f32 %v1299, 0.0
        %v1335 = vmax.f32 %v1302, 0.0
        %1336 = vst [vmem:[%s388] sm:$0xff] %v1304
        %1337 = vst [vmem:[%s388 + $0x8] sm:$0xff] %v1305
        %1338 = vst [vmem:[%s388 + $0x10] sm:$0xff] %v1306
        %1339 = vst [vmem:[%s388 + $0x18] sm:$0xff] %v1307
        %1340 = vst [vmem:[%s388 + $0x20] sm:$0xff] %v1308
        %1341 = vst [vmem:[%s388 + $0x28] sm:$0xff] %v1309
        %1342 = vst [vmem:[%s388 + $0x30] sm:$0xff] %v1310
        %1343 = vst [vmem:[%s388 + $0x38] sm:$0xff] %v1311
        %1344 = vst [vmem:[%s388 + $0x40] sm:$0xff] %v1312
        %1345 = vst [vmem:[%s388 + $0x48] sm:$0xff] %v1313
        %1346 = vst [vmem:[%s388 + $0x50] sm:$0xff] %v1314
        %1347 = vst [vmem:[%s388 + $0x58] sm:$0xff] %v1315
        %1348 = vst [vmem:[%s388 + $0x60] sm:$0xff] %v1316
        %1349 = vst [vmem:[%s388 + $0x68] sm:$0xff] %v1317
        %1350 = vst [vmem:[%s388 + $0x70] sm:$0xff] %v1318
        %1351 = vst [vmem:[%s388 + $0x78] sm:$0xff] %v1319
        %1352 = vst [vmem:[%s388 + $0x80] sm:$0xff] %v1320
        %1353 = vst [vmem:[%s388 + $0x88] sm:$0xff] %v1321
        %1354 = vst [vmem:[%s388 + $0x90] sm:$0xff] %v1322
        %1355 = vst [vmem:[%s388 + $0x98] sm:$0xff] %v1323
        %1356 = vst [vmem:[%s388 + $0xa0] sm:$0xff] %v1324
        %1357 = vst [vmem:[%s388 + $0xa8] sm:$0xff] %v1325
        %1358 = vst [vmem:[%s388 + $0xb0] sm:$0xff] %v1326
        %1359 = vst [vmem:[%s388 + $0xb8] sm:$0xff] %v1327
        %1360 = vst [vmem:[%s388 + $0xc0] sm:$0xff] %v1328
        %1361 = vst [vmem:[%s388 + $0xc8] sm:$0xff] %v1329
        %1362 = vst [vmem:[%s388 + $0xd0] sm:$0xff] %v1330
        %1363 = vst [vmem:[%s388 + $0xd8] sm:$0xff] %v1331
        %1364 = vst [vmem:[%s388 + $0xe0] sm:$0xff] %v1332
        %1365 = vst [vmem:[%s388 + $0xe8] sm:$0xff] %v1333
        %1366 = vst [vmem:[%s388 + $0xf0] sm:$0xff] %v1334
        %1367 = vst [vmem:[%s388 + $0xf8] sm:$0xff] %v1335
        %s1368 = sand.u32 %s221, 1
        %s1369 = scalar_lea.sflag [#allocation3], %s1368
        %s1370 = sand.u32 %s221, 1
        %s1371 = smul.addr %s1370, 256
        %s1372 = scalar_lea.vmem [#allocation2], %s1371
        // Predicated region
        $region49: #{tpu_custom_call.1} parent=47 // pred_check
          %p1373 = pneg %p231
        $region50: #{tpu_custom_call.1} parent=47 // pred_check_branch
          %1375 = sbr.rel (%p1373) target = $region52
        $region51: #{tpu_custom_call.1} parent=47 // pred_region
          %s1376 = smul.u32 16, %s26
          %1378 = vsyncadd %s1369, 0
          %s1379 = smul.addr %s1376, 2
          %s1380 = smul.addr %s25, 32
          %s1381 = sadd.s32 %s1379, %s1380
          %s1382 = smul.addr %s1381, 8
          %s1383 = scalar_lea.hbm %s7, %s1382
          %s1384 = sshll.u32 %s1372, 4
          %s1385 = int_to_ptr.vmem [resolvable:$true] %s1384
          %s1386 = sshll.u32 %s1383, 4
          %s1387 = int_to_ptr.hbm [resolvable:$true] %s1386
          %1392 = dma.vmem_to_hbm [thread:$0]  %s1385, 4096, %s1387, %s1369, 128, 128, 8
        $region52: #{tpu_custom_call.1} parent=47 // pred_fallthru
          _
      $region48: #{tpu_custom_call.1} parent=5 // pred_fallthru
        _
      %p1393 = scmp.le.s32.totalorder 2, %s16
      // Predicated region
      $region53: #{tpu_custom_call.1} parent=5 // pred_check
        %p1394 = pneg %p1393
      $region54: #{tpu_custom_call.1} parent=5 // pred_check_branch
        %1396 = sbr.rel (%p1394) target = $region56
      $region55: #{tpu_custom_call.1} parent=5 // pred_region
        %s1397 = ssub.s32 %s16, 2
        // Predicated region
        $region57: #{tpu_custom_call.1} parent=55 // pred_check
          %p1398 = pneg %p237
        $region58: #{tpu_custom_call.1} parent=55 // pred_check_branch
          %1400 = sbr.rel (%p1398) target = $region60
        $region59: #{tpu_custom_call.1} parent=55 // pred_region
          %s1401 = sand.u32 %s222, 1
          %s1402 = scalar_lea.sflag [#allocation3], %s1401
          %s1403 = sand.u32 %s222, 1
          %s1404 = smul.addr %s1403, 256
          %s1405 = scalar_lea.vmem [#allocation2], %s1404
          %1407 = dma.done %s1402, 4096
        $region60: #{tpu_custom_call.1} parent=55 // pred_fallthru
          _
      $region56: #{tpu_custom_call.1} parent=5 // pred_fallthru
        _
    $region6: #{tpu_custom_call.1} parent=1 // loop_footer
      %s20 = sadd.s32 1, %s16
    $region7: #{tpu_custom_call.1} parent=1 // loop_footer_branch
      %15 = sbr.rel target = $region3
    $region8: #{tpu_custom_call.1} parent=1 // loop_exit
      _
    %1408 = vsyncpa [#allocation3], 1
    %s1409 = scalar_lea.sflag [#allocation3], 1
    %1410 = vsyncpa %s1409, 1

</llo_original>
